<compile_context>
chip_gen: v7x
topology: tpu7x:2x2x1
jax: 0.10.0
libtpu: 0.0.40
codegen_flags: <defaults>
</compile_context>

<pallas_src>
import jax
import jax.numpy as jnp
from jax.experimental import pallas as pl
from jax.experimental.pallas import tpu as pltpu


# ----------------------------------------------------------------------------
# Kernel
# ----------------------------------------------------------------------------
def mlp_kernel(x_ref, w1_ref, b1_ref, w2_ref, b2_ref, w3_ref, b3_ref, o_ref):
    # Layer 1: cast the f32 x tile to the MXU dtype in-kernel (hidden under the
    # x DMA), accumulate in f32 on the MXU, add bias + ReLU in f32 (VPU).
    x = x_ref[...].astype(w1_ref.dtype)
    h1 = jnp.dot(x, w1_ref[...], preferred_element_type=jnp.float32)
    h1 = jnp.maximum(h1 + b1_ref[...], 0.0)

    # Layer 2: Linear(ch, ch) + ReLU.
    h2 = jnp.dot(h1.astype(w2_ref.dtype), w2_ref[...],
                 preferred_element_type=jnp.float32)
    h2 = jnp.maximum(h2 + b2_ref[...], 0.0)

    # Layer 3 (ch -> 1): per-row dot product as broadcast-multiply + lane
    # reduce.  Avoids an N=1 MXU matmul and any output lane padding; the true
    # (tb, 1) result is written directly.
    out = jnp.sum(h2 * w3_ref[...], axis=-1, keepdims=True) + b3_ref[...]
    o_ref[...] = out.astype(o_ref.dtype)


# ----------------------------------------------------------------------------
# One-time parameter preparation (hoisted out of the per-call forward)
# ----------------------------------------------------------------------------
def prepare_params(params, compute_dtype=jnp.bfloat16):
    """Cast the two hidden-layer weights to the MXU compute dtype and lay out
    the 1-wide head as an f32 (1, ch) row (so the kernel ends with a cheap
    lane reduce).  Call once; the forward reuses the result."""
    return {
        "w1": params["w1"].astype(compute_dtype),
        "b1": params["b1"].astype(jnp.float32),
        "w2": params["w2"].astype(compute_dtype),
        "b2": params["b2"].astype(jnp.float32),
        "w3_row": params["w3"].astype(jnp.float32).reshape(1, -1),  # (1, ch)
        "b3": params["b3"].astype(jnp.float32).reshape(1, 1),       # (1, 1)
    }


# ----------------------------------------------------------------------------
# Tiling / specs
# ----------------------------------------------------------------------------
def _choose_batch_tiling(B, tb_max=2048):
    """Pick (tb, nb): tb a multiple of 128 (<= tb_max), nb even and >= 2 so the
    'parallel' batch axis load-balances across v7x's two TensorCores."""
    nb = max(2, pl.cdiv(B, tb_max))
    if nb % 2:
        nb += 1
    tb = min(tb_max, max(128, pl.cdiv(pl.cdiv(B, nb), 128) * 128))
    nb = max(2, pl.cdiv(B, tb))
    if nb % 2:
        nb += 1
    return tb, nb


def _resident_spec(shape, single_buffer):
    """BlockSpec for a grid-invariant operand: constant index_map keeps it
    resident in VMEM for the whole grid; optionally single-buffered."""
    ndim = len(shape)
    index_map = lambda i: (0,) * ndim
    if single_buffer:
        return pl.BlockSpec(shape, index_map, pipeline_mode=pl.Buffered(1))
    return pl.BlockSpec(shape, index_map)


# ----------------------------------------------------------------------------
# Forward
# ----------------------------------------------------------------------------
def dnn_classifier_forward(x, prepared, *, tb=None, tb_max=2048):
    """x: (B, cin) float32; prepared: output of prepare_params().
    Returns (B, 1) float32, matching the PyTorch module's forward (up to bf16
    operand precision of the two hidden matmuls)."""
    B, cin = x.shape

    if tb is None:
        tb, nb = _choose_batch_tiling(B, tb_max)
    else:  # explicit tb must be a multiple of 8 (ideally 128)
        nb = max(2, pl.cdiv(B, tb))
        if nb % 2:
            nb += 1
    Bp = nb * tb
    x_pad = jnp.pad(x, ((0, Bp - B), (0, 0))) if Bp != B else x

    # VMEM budget: double-buffered x/out tiles (lane-padded to 128 in VMEM) +
    # resident params.  Cap at 48 MiB so this tiling also fits v7x (64 MiB).
    lane = 128
    est = (2 * tb * max(cin, lane) * x.dtype.itemsize   # x tiles
           + 2 * tb * lane * 4                          # (tb, 1) out tiles
           + 64 * 1024)                                 # params + slack
    vmem_limit = int(min(max(4 * est, 16 << 20), 48 << 20))

    names = ("w1", "b1", "w2", "b2", "w3_row", "b3")
    resident_args = [prepared[k] for k in names]

    def call(single_buffer_weights):
        in_specs = [pl.BlockSpec((tb, cin), lambda i: (i, 0))]   # pipelined x tile
        in_specs += [_resident_spec(prepared[k].shape, single_buffer_weights)
                     for k in names]
        return pl.pallas_call(
            mlp_kernel,
            out_shape=jax.ShapeDtypeStruct((Bp, 1), jnp.float32),
            grid_spec=pl.GridSpec(
                grid=(nb,),
                in_specs=in_specs,
                out_specs=pl.BlockSpec((tb, 1), lambda i: (i, 0)),
            ),
            compiler_params=pltpu.CompilerParams(
                dimension_semantics=("parallel",),   # megacore / v7x 2-TC sharding
                vmem_limit_bytes=vmem_limit,
            ),
        )(x_pad, *resident_args)

    try:
        out = call(single_buffer_weights=True)
    except Exception:
        # Fallback for jax versions where pipeline_mode=pl.Buffered(1) is not
        # accepted on the implicit pallas_call pipeline (weights are tiny, so
        # default double buffering only costs a few KiB of VMEM).
        out = call(single_buffer_weights=False)

    return out[:B]   # drop batch padding; feature dim is already the true width 1


# ----------------------------------------------------------------------------
# Params + references
# ----------------------------------------------------------------------------
def init_params(key, cin, ch):
    """nn.Linear-style init: U(-1/sqrt(fan_in), 1/sqrt(fan_in)); weights stored
    pre-transposed as (in, out)."""
    ks = jax.random.split(key, 6)

    def lin(kw, kb, fan_in, fan_out):
        bound = 1.0 / jnp.sqrt(fan_in)
        w = jax.random.uniform(kw, (fan_in, fan_out), jnp.float32, -bound, bound)
        b = jax.random.uniform(kb, (1, fan_out), jnp.float32, -bound, bound)
        return w, b

    w1, b1 = lin(ks[0], ks[1], cin, ch)
    w2, b2 = lin(ks[2], ks[3], ch, ch)
    w3, b3 = lin(ks[4], ks[5], ch, 1)
    return {"w1": w1, "b1": b1, "w2": w2, "b2": b2, "w3": w3, "b3": b3}


def reference_forward_f32(x, p):
    h1 = jnp.maximum(x @ p["w1"] + p["b1"], 0.0)
    h2 = jnp.maximum(h1 @ p["w2"] + p["b2"], 0.0)
    return h2 @ p["w3"] + p["b3"]


def reference_forward_bf16(x, prepared):
    """Pure-JAX reference matching the kernel's numerics (bf16 MXU operands,
    f32 accumulation, f32 lane-reduce head)."""
    h1 = jnp.dot(x.astype(prepared["w1"].dtype), prepared["w1"],
                 preferred_element_type=jnp.float32)
    h1 = jnp.maximum(h1 + prepared["b1"], 0.0)
    h2 = jnp.dot(h1.astype(prepared["w2"].dtype), prepared["w2"],
                 preferred_element_type=jnp.float32)
    h2 = jnp.maximum(h2 + prepared["b2"], 0.0)
    return jnp.sum(h2 * prepared["w3_row"], axis=-1, keepdims=True) + prepared["b3"]


# ----------------------------------------------------------------------------
# Demo / self-check
# ----------------------------------------------------------------------------
if __name__ == "__main__":
    key = jax.random.PRNGKey(0)
    kx, kp = jax.random.split(key)

    # Small shapes consistent with the module; B=384 exercises 2 batch tiles
    # (tb=256, nb=2) plus batch padding.
    B, cin, ch = 384, 16, 32
    x = jax.random.normal(kx, (B, cin), jnp.float32)
    params = init_params(kp, cin, ch)
    prepared = prepare_params(params)          # one-time prep, out of the forward

    out = jax.block_until_ready(dnn_classifier_forward(x, prepared))
    assert out.shape == (B, 1), out.shape

    ref_bf16 = reference_forward_bf16(x, prepared)
    ref_f32 = reference_forward_f32(x, params)
    assert jnp.allclose(out, ref_bf16, atol=2e-3, rtol=2e-3), "mismatch vs bf16-matched reference"
    assert jnp.allclose(out, ref_f32, atol=1e-1, rtol=1e-1), "mismatch vs f32 reference"

    # Ragged batch exercises the batch-padding path (tb=128, nb=2, Bp=256).
    out2 = jax.block_until_ready(dnn_classifier_forward(x[:200], prepared))
    assert out2.shape == (200, 1)
    assert jnp.allclose(out2, ref_bf16[:200], atol=2e-3, rtol=2e-3), "ragged-batch mismatch"

    print("KERNEL_OK")
</pallas_src>

<mosaic_0001>
module attributes {stable_mosaic.version = 11 : i64} {
  func.func @mlp_kernel(%arg0: i32, %arg1: memref<256x16xf32, #tpu.memory_space<vmem>>, %arg2: memref<16x32xbf16, #tpu.memory_space<vmem>>, %arg3: memref<1x32xf32, #tpu.memory_space<vmem>>, %arg4: memref<32x32xbf16, #tpu.memory_space<vmem>>, %arg5: memref<1x32xf32, #tpu.memory_space<vmem>>, %arg6: memref<1x32xf32, #tpu.memory_space<vmem>>, %arg7: memref<1x1xf32, #tpu.memory_space<vmem>>, %arg8: memref<256x1xf32, #tpu.memory_space<vmem>>) attributes {dimension_semantics = [#tpu.dimension_semantics<parallel>], iteration_bounds = array<i64: 2>, scalar_prefetch = 0 : i64, scratch_operands = 0 : i64, tpu.core_type = #tpu.core_type<tc>, window_params = [{transform_indices = @transform_0, window_bounds = array<i64: 256, 16>}, {pipeline_mode = #tpu.pipeline_mode<synchronous>, transform_indices = @transform_1, window_bounds = array<i64: 16, 32>}, {pipeline_mode = #tpu.pipeline_mode<synchronous>, transform_indices = @transform_2, window_bounds = array<i64: 1, 32>}, {pipeline_mode = #tpu.pipeline_mode<synchronous>, transform_indices = @transform_3, window_bounds = array<i64: 32, 32>}, {pipeline_mode = #tpu.pipeline_mode<synchronous>, transform_indices = @transform_4, window_bounds = array<i64: 1, 32>}, {pipeline_mode = #tpu.pipeline_mode<synchronous>, transform_indices = @transform_5, window_bounds = array<i64: 1, 32>}, {pipeline_mode = #tpu.pipeline_mode<synchronous>, transform_indices = @transform_6, window_bounds = array<i64: 1, 1>}, {transform_indices = @transform_7, window_bounds = array<i64: 256, 1>}]} {
    %c0 = arith.constant 0 : index
    %c0_0 = arith.constant 0 : index
    %0 = vector.load %arg1[%c0, %c0_0] : memref<256x16xf32, #tpu.memory_space<vmem>>, vector<256x16xf32>
    %1 = arith.truncf %0 : vector<256x16xf32> to vector<256x16xbf16>
    %c0_1 = arith.constant 0 : index
    %c0_2 = arith.constant 0 : index
    %2 = vector.load %arg2[%c0_1, %c0_2] : memref<16x32xbf16, #tpu.memory_space<vmem>>, vector<16x32xbf16>
    %cst = arith.constant dense<0.000000e+00> : vector<256x32xf32>
    %3 = tpu.matmul %1, %2, %cst {dimension_numbers = #tpu.dot_dimension_numbers<[1], [0], [0], [1], [0, 0, 1, 1], [], []>} : vector<256x16xbf16>, vector<16x32xbf16>, vector<256x32xf32> -> vector<256x32xf32>
    %c0_3 = arith.constant 0 : index
    %c0_4 = arith.constant 0 : index
    %4 = vector.load %arg3[%c0_3, %c0_4] : memref<1x32xf32, #tpu.memory_space<vmem>>, vector<1x32xf32>
    %5 = vector.broadcast %4 : vector<1x32xf32> to vector<256x32xf32>
    %6 = arith.addf %3, %5 : vector<256x32xf32>
    %cst_5 = arith.constant 0.000000e+00 : f32
    %7 = vector.broadcast %cst_5 : f32 to vector<256x32xf32>
    %8 = arith.maximumf %6, %7 : vector<256x32xf32>
    %9 = arith.truncf %8 : vector<256x32xf32> to vector<256x32xbf16>
    %c0_6 = arith.constant 0 : index
    %c0_7 = arith.constant 0 : index
    %10 = vector.load %arg4[%c0_6, %c0_7] : memref<32x32xbf16, #tpu.memory_space<vmem>>, vector<32x32xbf16>
    %cst_8 = arith.constant dense<0.000000e+00> : vector<256x32xf32>
    %11 = tpu.matmul %9, %10, %cst_8 {dimension_numbers = #tpu.dot_dimension_numbers<[1], [0], [0], [1], [0, 0, 1, 1], [], []>} : vector<256x32xbf16>, vector<32x32xbf16>, vector<256x32xf32> -> vector<256x32xf32>
    %c0_9 = arith.constant 0 : index
    %c0_10 = arith.constant 0 : index
    %12 = vector.load %arg5[%c0_9, %c0_10] : memref<1x32xf32, #tpu.memory_space<vmem>>, vector<1x32xf32>
    %13 = vector.broadcast %12 : vector<1x32xf32> to vector<256x32xf32>
    %14 = arith.addf %11, %13 : vector<256x32xf32>
    %cst_11 = arith.constant 0.000000e+00 : f32
    %15 = vector.broadcast %cst_11 : f32 to vector<256x32xf32>
    %16 = arith.maximumf %14, %15 : vector<256x32xf32>
    %c0_12 = arith.constant 0 : index
    %c0_13 = arith.constant 0 : index
    %17 = vector.load %arg6[%c0_12, %c0_13] : memref<1x32xf32, #tpu.memory_space<vmem>>, vector<1x32xf32>
    %18 = vector.broadcast %17 : vector<1x32xf32> to vector<256x32xf32>
    %19 = arith.mulf %16, %18 : vector<256x32xf32>
    %cst_14 = arith.constant dense<0.000000e+00> : vector<256xf32>
    %20 = vector.multi_reduction <add>, %19, %cst_14 [1] : vector<256x32xf32> to vector<256xf32>
    %21 = vector.shape_cast %20 : vector<256xf32> to vector<256x1xf32>
    %c0_15 = arith.constant 0 : index
    %c0_16 = arith.constant 0 : index
    %22 = vector.load %arg7[%c0_15, %c0_16] : memref<1x1xf32, #tpu.memory_space<vmem>>, vector<1x1xf32>
    %23 = vector.broadcast %22 : vector<1x1xf32> to vector<256x1xf32>
    %24 = arith.addf %21, %23 : vector<256x1xf32>
    %c0_17 = arith.constant 0 : index
    %c0_18 = arith.constant 0 : index
    %25 = vector.load %arg8[%c0_17, %c0_18] : memref<256x1xf32, #tpu.memory_space<vmem>>, vector<256x1xf32>
    tpu.vector_store %arg8[%c0_17, %c0_18], %24 {strides = array<i32>} : memref<256x1xf32, #tpu.memory_space<vmem>>, vector<256x1xf32>,
    return
  }
  func.func @transform_0(%arg0: i32) -> (i32, i32) {
    %c0_i32 = arith.constant 0 : i32
    %c0_i32_0 = arith.constant 0 : i32
    return %arg0, %c0_i32 : i32, i32
  }
  func.func @transform_1(%arg0: i32) -> (i32, i32) {
    %c0_i32 = arith.constant 0 : i32
    %c0_i32_0 = arith.constant 0 : i32
    %c0_i32_1 = arith.constant 0 : i32
    return %c0_i32, %c0_i32_0 : i32, i32
  }
  func.func @transform_2(%arg0: i32) -> (i32, i32) {
    %c0_i32 = arith.constant 0 : i32
    %c0_i32_0 = arith.constant 0 : i32
    %c0_i32_1 = arith.constant 0 : i32
    return %c0_i32, %c0_i32_0 : i32, i32
  }
  func.func @transform_3(%arg0: i32) -> (i32, i32) {
    %c0_i32 = arith.constant 0 : i32
    %c0_i32_0 = arith.constant 0 : i32
    %c0_i32_1 = arith.constant 0 : i32
    return %c0_i32, %c0_i32_0 : i32, i32
  }
  func.func @transform_4(%arg0: i32) -> (i32, i32) {
    %c0_i32 = arith.constant 0 : i32
    %c0_i32_0 = arith.constant 0 : i32
    %c0_i32_1 = arith.constant 0 : i32
    return %c0_i32, %c0_i32_0 : i32, i32
  }
  func.func @transform_5(%arg0: i32) -> (i32, i32) {
    %c0_i32 = arith.constant 0 : i32
    %c0_i32_0 = arith.constant 0 : i32
    %c0_i32_1 = arith.constant 0 : i32
    return %c0_i32, %c0_i32_0 : i32, i32
  }
  func.func @transform_6(%arg0: i32) -> (i32, i32) {
    %c0_i32 = arith.constant 0 : i32
    %c0_i32_0 = arith.constant 0 : i32
    %c0_i32_1 = arith.constant 0 : i32
    return %c0_i32, %c0_i32_0 : i32, i32
  }
  func.func @transform_7(%arg0: i32) -> (i32, i32) {
    %c0_i32 = arith.constant 0 : i32
    %c0_i32_0 = arith.constant 0 : i32
    return %arg0, %c0_i32 : i32, i32
  }
}

module attributes {stable_mosaic.version = 11 : i64} {
  func.func @mlp_kernel(%arg0: i32, %arg1: memref<256x16xf32, #tpu.memory_space<vmem>>, %arg2: memref<16x32xbf16, #tpu.memory_space<vmem>>, %arg3: memref<1x32xf32, #tpu.memory_space<vmem>>, %arg4: memref<32x32xbf16, #tpu.memory_space<vmem>>, %arg5: memref<1x32xf32, #tpu.memory_space<vmem>>, %arg6: memref<1x32xf32, #tpu.memory_space<vmem>>, %arg7: memref<1x1xf32, #tpu.memory_space<vmem>>, %arg8: memref<256x1xf32, #tpu.memory_space<vmem>>) attributes {dimension_semantics = [#tpu.dimension_semantics<parallel>], iteration_bounds = array<i64: 2>, scalar_prefetch = 0 : i64, scratch_operands = 0 : i64, tpu.core_type = #tpu.core_type<tc>, window_params = [{transform_indices = @transform_0, window_bounds = array<i64: 256, 16>}, {pipeline_mode = #tpu.pipeline_mode<synchronous>, transform_indices = @transform_1, window_bounds = array<i64: 16, 32>}, {pipeline_mode = #tpu.pipeline_mode<synchronous>, transform_indices = @transform_2, window_bounds = array<i64: 1, 32>}, {pipeline_mode = #tpu.pipeline_mode<synchronous>, transform_indices = @transform_3, window_bounds = array<i64: 32, 32>}, {pipeline_mode = #tpu.pipeline_mode<synchronous>, transform_indices = @transform_4, window_bounds = array<i64: 1, 32>}, {pipeline_mode = #tpu.pipeline_mode<synchronous>, transform_indices = @transform_5, window_bounds = array<i64: 1, 32>}, {pipeline_mode = #tpu.pipeline_mode<synchronous>, transform_indices = @transform_6, window_bounds = array<i64: 1, 1>}, {transform_indices = @transform_7, window_bounds = array<i64: 256, 1>}]} {
    %c0 = arith.constant 0 : index
    %c0_0 = arith.constant 0 : index
    %0 = vector.load %arg1[%c0, %c0_0] : memref<256x16xf32, #tpu.memory_space<vmem>>, vector<256x16xf32>
    %1 = arith.truncf %0 : vector<256x16xf32> to vector<256x16xbf16>
    %c0_1 = arith.constant 0 : index
    %c0_2 = arith.constant 0 : index
    %2 = vector.load %arg2[%c0_1, %c0_2] : memref<16x32xbf16, #tpu.memory_space<vmem>>, vector<16x32xbf16>
    %cst = arith.constant dense<0.000000e+00> : vector<256x32xf32>
    %3 = tpu.matmul %1, %2, %cst {dimension_numbers = #tpu.dot_dimension_numbers<[1], [0], [0], [1], [0, 0, 1, 1], [], []>} : vector<256x16xbf16>, vector<16x32xbf16>, vector<256x32xf32> -> vector<256x32xf32>
    %c0_3 = arith.constant 0 : index
    %c0_4 = arith.constant 0 : index
    %4 = vector.load %arg3[%c0_3, %c0_4] : memref<1x32xf32, #tpu.memory_space<vmem>>, vector<1x32xf32>
    %5 = vector.broadcast %4 : vector<1x32xf32> to vector<256x32xf32>
    %6 = arith.addf %3, %5 : vector<256x32xf32>
    %cst_5 = arith.constant 0.000000e+00 : f32
    %7 = vector.broadcast %cst_5 : f32 to vector<256x32xf32>
    %8 = arith.maximumf %6, %7 : vector<256x32xf32>
    %9 = arith.truncf %8 : vector<256x32xf32> to vector<256x32xbf16>
    %c0_6 = arith.constant 0 : index
    %c0_7 = arith.constant 0 : index
    %10 = vector.load %arg4[%c0_6, %c0_7] : memref<32x32xbf16, #tpu.memory_space<vmem>>, vector<32x32xbf16>
    %cst_8 = arith.constant dense<0.000000e+00> : vector<256x32xf32>
    %11 = tpu.matmul %9, %10, %cst_8 {dimension_numbers = #tpu.dot_dimension_numbers<[1], [0], [0], [1], [0, 0, 1, 1], [], []>} : vector<256x32xbf16>, vector<32x32xbf16>, vector<256x32xf32> -> vector<256x32xf32>
    %c0_9 = arith.constant 0 : index
    %c0_10 = arith.constant 0 : index
    %12 = vector.load %arg5[%c0_9, %c0_10] : memref<1x32xf32, #tpu.memory_space<vmem>>, vector<1x32xf32>
    %13 = vector.broadcast %12 : vector<1x32xf32> to vector<256x32xf32>
    %14 = arith.addf %11, %13 : vector<256x32xf32>
    %cst_11 = arith.constant 0.000000e+00 : f32
    %15 = vector.broadcast %cst_11 : f32 to vector<256x32xf32>
    %16 = arith.maximumf %14, %15 : vector<256x32xf32>
    %c0_12 = arith.constant 0 : index
    %c0_13 = arith.constant 0 : index
    %17 = vector.load %arg6[%c0_12, %c0_13] : memref<1x32xf32, #tpu.memory_space<vmem>>, vector<1x32xf32>
    %18 = vector.broadcast %17 : vector<1x32xf32> to vector<256x32xf32>
    %19 = arith.mulf %16, %18 : vector<256x32xf32>
    %cst_14 = arith.constant dense<0.000000e+00> : vector<256xf32>
    %20 = vector.multi_reduction <add>, %19, %cst_14 [1] : vector<256x32xf32> to vector<256xf32>
    %21 = vector.shape_cast %20 : vector<256xf32> to vector<256x1xf32>
    %c0_15 = arith.constant 0 : index
    %c0_16 = arith.constant 0 : index
    %22 = vector.load %arg7[%c0_15, %c0_16] : memref<1x1xf32, #tpu.memory_space<vmem>>, vector<1x1xf32>
    %23 = vector.broadcast %22 : vector<1x1xf32> to vector<256x1xf32>
    %24 = arith.addf %21, %23 : vector<256x1xf32>
    %c0_17 = arith.constant 0 : index
    %c0_18 = arith.constant 0 : index
    %25 = vector.load %arg8[%c0_17, %c0_18] : memref<256x1xf32, #tpu.memory_space<vmem>>, vector<256x1xf32>
    tpu.vector_store %arg8[%c0_17, %c0_18], %24 {strides = array<i32>} : memref<256x1xf32, #tpu.memory_space<vmem>>, vector<256x1xf32>,
    return
  }
  func.func @transform_0(%arg0: i32) -> (i32, i32) {
    %c0_i32 = arith.constant 0 : i32
    %c0_i32_0 = arith.constant 0 : i32
    return %arg0, %c0_i32 : i32, i32
  }
  func.func @transform_1(%arg0: i32) -> (i32, i32) {
    %c0_i32 = arith.constant 0 : i32
    %c0_i32_0 = arith.constant 0 : i32
    %c0_i32_1 = arith.constant 0 : i32
    return %c0_i32, %c0_i32_0 : i32, i32
  }
  func.func @transform_2(%arg0: i32) -> (i32, i32) {
    %c0_i32 = arith.constant 0 : i32
    %c0_i32_0 = arith.constant 0 : i32
    %c0_i32_1 = arith.constant 0 : i32
    return %c0_i32, %c0_i32_0 : i32, i32
  }
  func.func @transform_3(%arg0: i32) -> (i32, i32) {
    %c0_i32 = arith.constant 0 : i32
    %c0_i32_0 = arith.constant 0 : i32
    %c0_i32_1 = arith.constant 0 : i32
    return %c0_i32, %c0_i32_0 : i32, i32
  }
  func.func @transform_4(%arg0: i32) -> (i32, i32) {
    %c0_i32 = arith.constant 0 : i32
    %c0_i32_0 = arith.constant 0 : i32
    %c0_i32_1 = arith.constant 0 : i32
    return %c0_i32, %c0_i32_0 : i32, i32
  }
  func.func @transform_5(%arg0: i32) -> (i32, i32) {
    %c0_i32 = arith.constant 0 : i32
    %c0_i32_0 = arith.constant 0 : i32
    %c0_i32_1 = arith.constant 0 : i32
    return %c0_i32, %c0_i32_0 : i32, i32
  }
  func.func @transform_6(%arg0: i32) -> (i32, i32) {
    %c0_i32 = arith.constant 0 : i32
    %c0_i32_0 = arith.constant 0 : i32
    %c0_i32_1 = arith.constant 0 : i32
    return %c0_i32, %c0_i32_0 : i32, i32
  }
  func.func @transform_7(%arg0: i32) -> (i32, i32) {
    %c0_i32 = arith.constant 0 : i32
    %c0_i32_0 = arith.constant 0 : i32
    return %arg0, %c0_i32 : i32, i32
  }
}

</mosaic_0001>

<llo_original>
// kernel: tpu_custom_call.1
$region0: #{tpu_custom_call.1}
  #allocation0 [shape = 'u32[]', space=smem, size = 0x4, offset = 0x4, fixed_abs, tag = 'smem constant byte address 0x4 - core index']
  #allocation1 [shape = 'u32[144,128]{1,0:T(1,128)}', space=vmem, size = 0x12000, scoped, tag = 'internal scratch']
  #allocation2 [shape = 'f32[1,1]{1,0:T(1,128)S(1)}', space=vmem, size = 0x200, scoped, tag = 'scoped memory for tpu_custom_call.1']
  %s0 = inlined_call_operand.vmem [shape: f32[512,16], index: 0, kind: input, shape index: {}]
  %s1 = inlined_call_operand.vmem [shape: bf16[16,32], index: 1, kind: input, shape index: {}]
  %s2 = inlined_call_operand.vmem [shape: f32[1,32], index: 2, kind: input, shape index: {}]
  %s3 = inlined_call_operand.vmem [shape: bf16[32,32], index: 3, kind: input, shape index: {}]
  %s4 = inlined_call_operand.vmem [shape: f32[1,32], index: 4, kind: input, shape index: {}]
  %s5 = inlined_call_operand.vmem [shape: f32[1,32], index: 5, kind: input, shape index: {}]
  %s6 = inlined_call_operand.<no memory space> [shape: f32[1,1], index: 6, kind: input, shape index: {}]
  %s7 = inlined_call_operand.vmem [shape: f32[512,1], index: 7, kind: output, shape index: {}]
  %s8 = sld [smem:[#allocation0]]
  $region61: #{tpu_custom_call.1} parent=0
    _
  %s10 = ssub.s32 1, %s8
  %s11 = scalar_select 0, %s10, %s8
  %v12 = vstv %s6
  %13 = vst [vmem:[#allocation2] sm:$0x1] %v12
  loop: start=0, step=1, limit=4
  $region2: #{tpu_custom_call.1} parent=0 // loop_pre_header
    _
  $region3: #{tpu_custom_call.1} parent=0 // loop_header
    %s15 = sphi 0, %s19
    %p16 = scmp.ge.s32.totalorder %s15, 4
    %s25 = sphi 0, %s27
    %s28 = sphi 0, %s25
    %s29 = sphi 0, %s28
    %s45 = sphi 0, %s29
    %s49 = sphi 0, %s49
    %s51 = sphi 0, %s49
    %s52 = sphi 0, %s51
    %s66 = sphi 0, %s52
    %s70 = sphi 0, %s70
    %s72 = sphi 0, %s70
    %s73 = sphi 0, %s72
    %s87 = sphi 0, %s73
    %s91 = sphi 0, %s91
    %s93 = sphi 0, %s91
    %s94 = sphi 0, %s93
    %s108 = sphi 0, %s94
    %s112 = sphi 0, %s112
    %s114 = sphi 0, %s112
    %s115 = sphi 0, %s114
    %s129 = sphi 0, %s115
    %s133 = sphi 0, %s133
    %s135 = sphi 0, %s133
    %s136 = sphi 0, %s135
    %s150 = sphi 0, %s136
    %s154 = sphi 0, %s154
    %s156 = sphi 0, %s154
    %s157 = sphi 0, %s156
    %s171 = sphi 0, %s157
    %s177 = sphi 0, %s179
    %s180 = sphi 0, %s177
    %s181 = sphi 0, %s180
    %s197 = sphi 0, %s181
  $region4: #{tpu_custom_call.1} parent=0 // loop_header_branch
    %18 = sbr.rel (%p16) target = $region8
  $region5: #{tpu_custom_call.1} parent=0 // loop_body
    %s20 = ssub.s32 %s15, 1
    %s21 = ssub.s32 %s15, 2
    %s22 = sadd.s32 %s15, 1
    %s23 = ssub.s32 %s15, %s22
    %p24 = scmp.eq.s32.totalorder %s23, 0
    %s26 = sadd.s32 %s25, 1
    %s27 = scalar_select %p24, %s25, %s26
    %p30 = pneg %p24
    %p31 = scmp.eq.s32.totalorder %s15, 1
    %p32 = por %p30, %p31
    %p33 = scmp.ne.s32.totalorder %s25, %s28
    %p34 = scmp.eq.s32.totalorder %s15, 0
    %p35 = por %p33, %p34
    %p36 = scmp.ne.s32.totalorder %s25, %s28
    %p37 = scmp.eq.s32.totalorder %s20, 1
    %p38 = por %p36, %p37
    %p39 = scmp.ne.s32.totalorder %s28, %s29
    %p40 = scmp.eq.s32.totalorder %s20, 0
    %p41 = por %p39, %p40
    %p42 = scmp.ne.s32.totalorder %s28, %s29
    %p43 = scmp.eq.s32.totalorder %s21, 1
    %p44 = por %p42, %p43
    %p46 = scmp.ne.s32.totalorder %s29, %s45
    %p47 = scmp.eq.s32.totalorder %s21, 0
    %p48 = por %p46, %p47
    %s50 = sadd.s32 %s49, 1
    %p53 = scmp.eq.s32.totalorder %s15, 1
    %p54 = scmp.ne.s32.totalorder %s49, %s51
    %p55 = scmp.eq.s32.totalorder %s15, 0
    %p56 = por %p54, %p55
    %p57 = scmp.ne.s32.totalorder %s49, %s51
    %p58 = scmp.eq.s32.totalorder %s20, 1
    %p59 = por %p57, %p58
    %p60 = scmp.ne.s32.totalorder %s51, %s52
    %p61 = scmp.eq.s32.totalorder %s20, 0
    %p62 = por %p60, %p61
    %p63 = scmp.ne.s32.totalorder %s51, %s52
    %p64 = scmp.eq.s32.totalorder %s21, 1
    %p65 = por %p63, %p64
    %p67 = scmp.ne.s32.totalorder %s52, %s66
    %p68 = scmp.eq.s32.totalorder %s21, 0
    %p69 = por %p67, %p68
    %s71 = sadd.s32 %s70, 1
    %p74 = scmp.eq.s32.totalorder %s15, 1
    %p75 = scmp.ne.s32.totalorder %s70, %s72
    %p76 = scmp.eq.s32.totalorder %s15, 0
    %p77 = por %p75, %p76
    %p78 = scmp.ne.s32.totalorder %s70, %s72
    %p79 = scmp.eq.s32.totalorder %s20, 1
    %p80 = por %p78, %p79
    %p81 = scmp.ne.s32.totalorder %s72, %s73
    %p82 = scmp.eq.s32.totalorder %s20, 0
    %p83 = por %p81, %p82
    %p84 = scmp.ne.s32.totalorder %s72, %s73
    %p85 = scmp.eq.s32.totalorder %s21, 1
    %p86 = por %p84, %p85
    %p88 = scmp.ne.s32.totalorder %s73, %s87
    %p89 = scmp.eq.s32.totalorder %s21, 0
    %p90 = por %p88, %p89
    %s92 = sadd.s32 %s91, 1
    %p95 = scmp.eq.s32.totalorder %s15, 1
    %p96 = scmp.ne.s32.totalorder %s91, %s93
    %p97 = scmp.eq.s32.totalorder %s15, 0
    %p98 = por %p96, %p97
    %p99 = scmp.ne.s32.totalorder %s91, %s93
    %p100 = scmp.eq.s32.totalorder %s20, 1
    %p101 = por %p99, %p100
    %p102 = scmp.ne.s32.totalorder %s93, %s94
    %p103 = scmp.eq.s32.totalorder %s20, 0
    %p104 = por %p102, %p103
    %p105 = scmp.ne.s32.totalorder %s93, %s94
    %p106 = scmp.eq.s32.totalorder %s21, 1
    %p107 = por %p105, %p106
    %p109 = scmp.ne.s32.totalorder %s94, %s108
    %p110 = scmp.eq.s32.totalorder %s21, 0
    %p111 = por %p109, %p110
    %s113 = sadd.s32 %s112, 1
    %p116 = scmp.eq.s32.totalorder %s15, 1
    %p117 = scmp.ne.s32.totalorder %s112, %s114
    %p118 = scmp.eq.s32.totalorder %s15, 0
    %p119 = por %p117, %p118
    %p120 = scmp.ne.s32.totalorder %s112, %s114
    %p121 = scmp.eq.s32.totalorder %s20, 1
    %p122 = por %p120, %p121
    %p123 = scmp.ne.s32.totalorder %s114, %s115
    %p124 = scmp.eq.s32.totalorder %s20, 0
    %p125 = por %p123, %p124
    %p126 = scmp.ne.s32.totalorder %s114, %s115
    %p127 = scmp.eq.s32.totalorder %s21, 1
    %p128 = por %p126, %p127
    %p130 = scmp.ne.s32.totalorder %s115, %s129
    %p131 = scmp.eq.s32.totalorder %s21, 0
    %p132 = por %p130, %p131
    %s134 = sadd.s32 %s133, 1
    %p137 = scmp.eq.s32.totalorder %s15, 1
    %p138 = scmp.ne.s32.totalorder %s133, %s135
    %p139 = scmp.eq.s32.totalorder %s15, 0
    %p140 = por %p138, %p139
    %p141 = scmp.ne.s32.totalorder %s133, %s135
    %p142 = scmp.eq.s32.totalorder %s20, 1
    %p143 = por %p141, %p142
    %p144 = scmp.ne.s32.totalorder %s135, %s136
    %p145 = scmp.eq.s32.totalorder %s20, 0
    %p146 = por %p144, %p145
    %p147 = scmp.ne.s32.totalorder %s135, %s136
    %p148 = scmp.eq.s32.totalorder %s21, 1
    %p149 = por %p147, %p148
    %p151 = scmp.ne.s32.totalorder %s136, %s150
    %p152 = scmp.eq.s32.totalorder %s21, 0
    %p153 = por %p151, %p152
    %s155 = sadd.s32 %s154, 1
    %p158 = scmp.eq.s32.totalorder %s15, 1
    %p159 = scmp.ne.s32.totalorder %s154, %s156
    %p160 = scmp.eq.s32.totalorder %s15, 0
    %p161 = por %p159, %p160
    %p162 = scmp.ne.s32.totalorder %s154, %s156
    %p163 = scmp.eq.s32.totalorder %s20, 1
    %p164 = por %p162, %p163
    %p165 = scmp.ne.s32.totalorder %s156, %s157
    %p166 = scmp.eq.s32.totalorder %s20, 0
    %p167 = por %p165, %p166
    %p168 = scmp.ne.s32.totalorder %s156, %s157
    %p169 = scmp.eq.s32.totalorder %s21, 1
    %p170 = por %p168, %p169
    %p172 = scmp.ne.s32.totalorder %s157, %s171
    %p173 = scmp.eq.s32.totalorder %s21, 0
    %p174 = por %p172, %p173
    %s175 = ssub.s32 %s15, %s22
    %p176 = scmp.eq.s32.totalorder %s175, 0
    %s178 = sadd.s32 %s177, 1
    %s179 = scalar_select %p176, %s177, %s178
    %p182 = pneg %p176
    %p183 = scmp.eq.s32.totalorder %s15, 1
    %p184 = por %p182, %p183
    %p185 = scmp.ne.s32.totalorder %s177, %s180
    %p186 = scmp.eq.s32.totalorder %s15, 0
    %p187 = por %p185, %p186
    %p188 = scmp.ne.s32.totalorder %s177, %s180
    %p189 = scmp.eq.s32.totalorder %s20, 1
    %p190 = por %p188, %p189
    %p191 = scmp.ne.s32.totalorder %s180, %s181
    %p192 = scmp.eq.s32.totalorder %s20, 0
    %p193 = por %p191, %p192
    %p194 = scmp.ne.s32.totalorder %s180, %s181
    %p195 = scmp.eq.s32.totalorder %s21, 1
    %p196 = por %p194, %p195
    %p198 = scmp.ne.s32.totalorder %s181, %s197
    %p199 = scmp.eq.s32.totalorder %s21, 0
    %p200 = por %p198, %p199
    %p201 = scmp.le.s32.totalorder 1, %s15
    %p202 = scmp.lt.s32.totalorder %s15, 3
    %p203 = pnand %p201, %p202
    %p204 = pneg %p203
    // Predicated region
    $region9: #{tpu_custom_call.1} parent=5 // pred_check
      _
    $region10: #{tpu_custom_call.1} parent=5 // pred_check_branch
      %206 = sbr.rel (%p203) target = $region12
    $region11: #{tpu_custom_call.1} parent=5 // pred_region
      %s207 = ssub.s32 %s15, 1
      // Predicated region
      $region13: #{tpu_custom_call.1} parent=11 // pred_check
        %p208 = pneg %p62
      $region14: #{tpu_custom_call.1} parent=11 // pred_check_branch
        %210 = sbr.rel (%p208) target = $region16
      $region15: #{tpu_custom_call.1} parent=11 // pred_region
        _
      $region16: #{tpu_custom_call.1} parent=11 // pred_fallthru
        _
      // Predicated region
      $region17: #{tpu_custom_call.1} parent=11 // pred_check
        %p211 = pneg %p83
      $region18: #{tpu_custom_call.1} parent=11 // pred_check_branch
        %213 = sbr.rel (%p211) target = $region20
      $region19: #{tpu_custom_call.1} parent=11 // pred_region
        _
      $region20: #{tpu_custom_call.1} parent=11 // pred_fallthru
        _
      // Predicated region
      $region21: #{tpu_custom_call.1} parent=11 // pred_check
        %p214 = pneg %p104
      $region22: #{tpu_custom_call.1} parent=11 // pred_check_branch
        %216 = sbr.rel (%p214) target = $region24
      $region23: #{tpu_custom_call.1} parent=11 // pred_region
        _
      $region24: #{tpu_custom_call.1} parent=11 // pred_fallthru
        _
      // Predicated region
      $region25: #{tpu_custom_call.1} parent=11 // pred_check
        %p217 = pneg %p125
      $region26: #{tpu_custom_call.1} parent=11 // pred_check_branch
        %219 = sbr.rel (%p217) target = $region28
      $region27: #{tpu_custom_call.1} parent=11 // pred_region
        _
      $region28: #{tpu_custom_call.1} parent=11 // pred_fallthru
        _
      // Predicated region
      $region29: #{tpu_custom_call.1} parent=11 // pred_check
        %p220 = pneg %p146
      $region30: #{tpu_custom_call.1} parent=11 // pred_check_branch
        %222 = sbr.rel (%p220) target = $region32
      $region31: #{tpu_custom_call.1} parent=11 // pred_region
        _
      $region32: #{tpu_custom_call.1} parent=11 // pred_fallthru
        _
      // Predicated region
      $region33: #{tpu_custom_call.1} parent=11 // pred_check
        %p223 = pneg %p167
      $region34: #{tpu_custom_call.1} parent=11 // pred_check_branch
        %225 = sbr.rel (%p223) target = $region36
      $region35: #{tpu_custom_call.1} parent=11 // pred_region
        _
      $region36: #{tpu_custom_call.1} parent=11 // pred_fallthru
        _
    $region12: #{tpu_custom_call.1} parent=5 // pred_fallthru
      _
    %p226 = scmp.lt.s32.totalorder %s15, 2
    // Predicated region
    $region37: #{tpu_custom_call.1} parent=5 // pred_check
      %p227 = pneg %p226
    $region38: #{tpu_custom_call.1} parent=5 // pred_check_branch
      %229 = sbr.rel (%p227) target = $region40
    $region39: #{tpu_custom_call.1} parent=5 // pred_region
      // Predicated region
      $region41: #{tpu_custom_call.1} parent=39 // pred_check
        %p230 = pneg %p35
      $region42: #{tpu_custom_call.1} parent=39 // pred_check_branch
        %232 = sbr.rel (%p230) target = $region44
      $region43: #{tpu_custom_call.1} parent=39 // pred_region
        %s233 = smul.u32 32, %s15
        %p234 = scmp.lt.s32.totalorder %s233, 63
        %s235 = scalar_select %p234, %s233, 63
        %s236 = smul.addr %s235, 8
        %s237 = scalar_lea.vmem %s0, %s236
        %s238 = smul.u32 32, %s15
      $region44: #{tpu_custom_call.1} parent=39 // pred_fallthru
        _
    $region40: #{tpu_custom_call.1} parent=5 // pred_fallthru
      _
    %p239 = scmp.le.s32.totalorder 1, %s15
    %p240 = scmp.lt.s32.totalorder %s15, 3
    %p241 = pnand %p239, %p240
    %p242 = pneg %p241
    // Predicated region
    $region45: #{tpu_custom_call.1} parent=5 // pred_check
      _
    $region46: #{tpu_custom_call.1} parent=5 // pred_check_branch
      %244 = sbr.rel (%p241) target = $region48
    $region47: #{tpu_custom_call.1} parent=5 // pred_region
      %s245 = ssub.s32 %s15, 1
      %s246 = smul.u32 32, %s20
      %p247 = scmp.lt.s32.totalorder %s246, 63
      %s248 = scalar_select %p247, %s246, 63
      %s249 = smul.addr %s248, 8
      %s250 = scalar_lea.vmem %s0, %s249
      %p251 = pneg %p41
      %p252 = pneg %p38
      %p253 = pneg %p62
      %p254 = pneg %p59
      %p255 = pneg %p83
      %p256 = pneg %p80
      %p257 = pneg %p104
      %p258 = pneg %p101
      %p259 = pneg %p125
      %p260 = pneg %p122
      %p261 = pneg %p146
      %p262 = pneg %p143
      %p263 = pneg %p167
      %p264 = pneg %p164
      %p265 = pneg %p193
      %p266 = pneg %p190
      %s267 = smul.u32 32, %s20
      %p268 = scmp.lt.s32.totalorder %s267, 63
      %s269 = scalar_select %p268, %s267, 63
      %s270 = smul.addr %s269, 8
      %s271 = scalar_lea.vmem %s7, %s270
      %s272 = smul.u32 32, %s20
      %p273 = scmp.lt.s32.totalorder %s272, 63
      %s274 = scalar_select %p273, %s272, 63
      %s275 = smul.addr %s274, 8
      %s276 = scalar_lea.vmem %s0, %s275
      %s277 = smul.u32 32, %s20
      %s278 = smul.u32 32, %s20
      %p279 = scmp.lt.s32.totalorder %s278, 63
      %s280 = scalar_select %p279, %s278, 63
      %s281 = smul.addr %s280, 8
      %s282 = scalar_lea.vmem %s7, %s281
      %s283 = smul.u32 32, %s20
      %v285 = vld [vmem:[%s276] sm:$0xff]
      %v286 = vld [vmem:[%s276 + $0x8] sm:$0xff]
      %v287 = vld [vmem:[%s276 + $0x10] sm:$0xff]
      %v288 = vld [vmem:[%s276 + $0x18] sm:$0xff]
      %v289 = vld [vmem:[%s276 + $0x20] sm:$0xff]
      %v290 = vld [vmem:[%s276 + $0x28] sm:$0xff]
      %v291 = vld [vmem:[%s276 + $0x30] sm:$0xff]
      %v292 = vld [vmem:[%s276 + $0x38] sm:$0xff]
      %v293 = vld [vmem:[%s276 + $0x40] sm:$0xff]
      %v294 = vld [vmem:[%s276 + $0x48] sm:$0xff]
      %v295 = vld [vmem:[%s276 + $0x50] sm:$0xff]
      %v296 = vld [vmem:[%s276 + $0x58] sm:$0xff]
      %v297 = vld [vmem:[%s276 + $0x60] sm:$0xff]
      %v298 = vld [vmem:[%s276 + $0x68] sm:$0xff]
      %v299 = vld [vmem:[%s276 + $0x70] sm:$0xff]
      %v300 = vld [vmem:[%s276 + $0x78] sm:$0xff]
      %v301 = vld [vmem:[%s276 + $0x80] sm:$0xff]
      %v302 = vld [vmem:[%s276 + $0x88] sm:$0xff]
      %v303 = vld [vmem:[%s276 + $0x90] sm:$0xff]
      %v304 = vld [vmem:[%s276 + $0x98] sm:$0xff]
      %v305 = vld [vmem:[%s276 + $0xa0] sm:$0xff]
      %v306 = vld [vmem:[%s276 + $0xa8] sm:$0xff]
      %v307 = vld [vmem:[%s276 + $0xb0] sm:$0xff]
      %v308 = vld [vmem:[%s276 + $0xb8] sm:$0xff]
      %v309 = vld [vmem:[%s276 + $0xc0] sm:$0xff]
      %v310 = vld [vmem:[%s276 + $0xc8] sm:$0xff]
      %v311 = vld [vmem:[%s276 + $0xd0] sm:$0xff]
      %v312 = vld [vmem:[%s276 + $0xd8] sm:$0xff]
      %v313 = vld [vmem:[%s276 + $0xe0] sm:$0xff]
      %v314 = vld [vmem:[%s276 + $0xe8] sm:$0xff]
      %v315 = vld [vmem:[%s276 + $0xf0] sm:$0xff]
      %v316 = vld [vmem:[%s276 + $0xf8] sm:$0xff]
      %v317 = vpack.c.bf16 %v286, %v285
      %v318 = vpack.c.bf16 %v288, %v287
      %v319 = vpack.c.bf16 %v290, %v289
      %v320 = vpack.c.bf16 %v292, %v291
      %v321 = vpack.c.bf16 %v294, %v293
      %v322 = vpack.c.bf16 %v296, %v295
      %v323 = vpack.c.bf16 %v298, %v297
      %v324 = vpack.c.bf16 %v300, %v299
      %v325 = vpack.c.bf16 %v302, %v301
      %v326 = vpack.c.bf16 %v304, %v303
      %v327 = vpack.c.bf16 %v306, %v305
      %v328 = vpack.c.bf16 %v308, %v307
      %v329 = vpack.c.bf16 %v310, %v309
      %v330 = vpack.c.bf16 %v312, %v311
      %v331 = vpack.c.bf16 %v314, %v313
      %v332 = vpack.c.bf16 %v316, %v315
      %v333 = vld [vmem:[%s1] sm:$0xf]
      %v334 = vld [vmem:[%s1 + $0x4] sm:$0xf]
      %v335 = vld [vmem:[%s2] sm:$0x1]
      %v337 = vlaneseq
      %v338 = vshrl.u32 %v337, 7
      %v339 = vsub.s32 0, %v338
      %v340 = vrot.slane %v335, %v339
      %v344 = vunpack.c.l.b16 %v333
      %v345 = vunpack.c.l.b16 %v334
      %v346 = vpack.c.b16 %v345, %v344
      %vm348 = vcmask 130048
      %v350 = vsel %vm348, %v317, 0
      %v353 = vsel %vm348, %v318, 0
      %v356 = vsel %vm348, %v319, 0
      %v359 = vsel %vm348, %v320, 0
      %v362 = vsel %vm348, %v321, 0
      %v365 = vsel %vm348, %v322, 0
      %v368 = vsel %vm348, %v323, 0
      %v371 = vsel %vm348, %v324, 0
      %v374 = vsel %vm348, %v325, 0
      %v377 = vsel %vm348, %v326, 0
      %v380 = vsel %vm348, %v327, 0
      %v383 = vsel %vm348, %v328, 0
      %v386 = vsel %vm348, %v329, 0
      %v389 = vsel %vm348, %v330, 0
      %v392 = vsel %vm348, %v331, 0
      %v395 = vsel %vm348, %v332, 0
      %397 = vmatprep.subr.bf16.mxu0 0
      %398 = vmatpush1.bf16.msra.mxu0 %v346
      %399 = vmatprep.subr.bf16.mxu0 0
      %400 = vmatpush1.bf16.msra.mxu0 0
      %401 = vmatprep.subr.bf16.mxu0 0
      %402 = vmatpush1.bf16.msra.mxu0 0
      %403 = vmatprep.subr.bf16.mxu0 0
      %404 = vmatpush1.bf16.msra.mxu0 0
      %405 = vmatprep.subr.bf16.mxu0 0
      %406 = vmatpush1.bf16.msra.mxu0 0
      %407 = vmatprep.subr.bf16.mxu0 0
      %408 = vmatpush1.bf16.msra.mxu0 0
      %409 = vmatprep.subr.bf16.mxu0 0
      %410 = vmatpush1.bf16.msra.mxu0 0
      %411 = vmatprep.subr.bf16.mxu0 0
      %412 = vmatpush1.bf16.msra.mxu0 0
      %413 = vmatprep.subr.bf16.mxu0 0
      %414 = vmatpush1.bf16.msra.mxu0 0
      %415 = vmatprep.subr.bf16.mxu0 0
      %416 = vmatpush1.bf16.msra.mxu0 0
      %417 = vmatprep.subr.bf16.mxu0 0
      %418 = vmatpush1.bf16.msra.mxu0 0
      %419 = vmatprep.subr.bf16.mxu0 0
      %420 = vmatpush1.bf16.msra.mxu0 0
      %421 = vmatprep.subr.bf16.mxu0 0
      %422 = vmatpush1.bf16.msra.mxu0 0
      %423 = vmatprep.subr.bf16.mxu0 0
      %424 = vmatpush1.bf16.msra.mxu0 0
      %425 = vmatprep.subr.bf16.mxu0 0
      %426 = vmatpush1.bf16.msra.mxu0 0
      %427 = vmatprep.subr.bf16.mxu0 0
      %428 = vmatpush1.bf16.msra.mxu0 0
      %429 = vmatprep.mubr.bf16.mxu0 0
      %430 = vmatmul.mubr.bf16.gmra.mrb[0].mxu0 %v350
      %v431 = vpop.f32.mrb[0].mxu0
      %v432 = vadd.f32 %v340, %v431
      %v433 = vpop.f32.mrb[0].mxu0
      %v434 = vpop.f32.mrb[0].mxu0
      %v435 = vadd.f32 %v340, %v434
      %v436 = vpop.f32.mrb[0].mxu0
      %437 = vmatprep.mubr.bf16.mxu0 0
      %438 = vmatmul.mubr.bf16.gmra.mrb[0].mxu0 %v353
      %v439 = vpop.f32.mrb[0].mxu0
      %v440 = vadd.f32 %v340, %v439
      %v441 = vpop.f32.mrb[0].mxu0
      %v442 = vpop.f32.mrb[0].mxu0
      %v443 = vadd.f32 %v340, %v442
      %v444 = vpop.f32.mrb[0].mxu0
      %445 = vmatprep.mubr.bf16.mxu0 0
      %446 = vmatmul.mubr.bf16.gmra.mrb[0].mxu0 %v356
      %v447 = vpop.f32.mrb[0].mxu0
      %v448 = vadd.f32 %v340, %v447
      %v449 = vpop.f32.mrb[0].mxu0
      %v450 = vpop.f32.mrb[0].mxu0
      %v451 = vadd.f32 %v340, %v450
      %v452 = vpop.f32.mrb[0].mxu0
      %453 = vmatprep.mubr.bf16.mxu0 0
      %454 = vmatmul.mubr.bf16.gmra.mrb[0].mxu0 %v359
      %v455 = vpop.f32.mrb[0].mxu0
      %v456 = vadd.f32 %v340, %v455
      %v457 = vpop.f32.mrb[0].mxu0
      %v458 = vpop.f32.mrb[0].mxu0
      %v459 = vadd.f32 %v340, %v458
      %v460 = vpop.f32.mrb[0].mxu0
      %461 = vmatprep.mubr.bf16.mxu0 0
      %462 = vmatmul.mubr.bf16.gmra.mrb[0].mxu0 %v362
      %v463 = vpop.f32.mrb[0].mxu0
      %v464 = vadd.f32 %v340, %v463
      %v465 = vpop.f32.mrb[0].mxu0
      %v466 = vpop.f32.mrb[0].mxu0
      %v467 = vadd.f32 %v340, %v466
      %v468 = vpop.f32.mrb[0].mxu0
      %469 = vmatprep.mubr.bf16.mxu0 0
      %470 = vmatmul.mubr.bf16.gmra.mrb[0].mxu0 %v365
      %v471 = vpop.f32.mrb[0].mxu0
      %v472 = vadd.f32 %v340, %v471
      %v473 = vpop.f32.mrb[0].mxu0
      %v474 = vpop.f32.mrb[0].mxu0
      %v475 = vadd.f32 %v340, %v474
      %v476 = vpop.f32.mrb[0].mxu0
      %477 = vmatprep.mubr.bf16.mxu0 0
      %478 = vmatmul.mubr.bf16.gmra.mrb[0].mxu0 %v368
      %v479 = vpop.f32.mrb[0].mxu0
      %v480 = vadd.f32 %v340, %v479
      %v481 = vpop.f32.mrb[0].mxu0
      %v482 = vpop.f32.mrb[0].mxu0
      %v483 = vadd.f32 %v340, %v482
      %v484 = vpop.f32.mrb[0].mxu0
      %485 = vmatprep.mubr.bf16.mxu0 0
      %486 = vmatmul.mubr.bf16.gmra.mrb[0].mxu0 %v371
      %v487 = vpop.f32.mrb[0].mxu0
      %v488 = vadd.f32 %v340, %v487
      %v489 = vpop.f32.mrb[0].mxu0
      %v490 = vpop.f32.mrb[0].mxu0
      %v491 = vadd.f32 %v340, %v490
      %v492 = vpop.f32.mrb[0].mxu0
      %493 = vmatprep.mubr.bf16.mxu0 0
      %494 = vmatmul.mubr.bf16.gmra.mrb[0].mxu0 %v374
      %v495 = vpop.f32.mrb[0].mxu0
      %v496 = vadd.f32 %v340, %v495
      %v497 = vpop.f32.mrb[0].mxu0
      %v498 = vpop.f32.mrb[0].mxu0
      %v499 = vadd.f32 %v340, %v498
      %v500 = vpop.f32.mrb[0].mxu0
      %501 = vmatprep.mubr.bf16.mxu0 0
      %502 = vmatmul.mubr.bf16.gmra.mrb[0].mxu0 %v377
      %v503 = vpop.f32.mrb[0].mxu0
      %v504 = vadd.f32 %v340, %v503
      %v505 = vpop.f32.mrb[0].mxu0
      %v506 = vpop.f32.mrb[0].mxu0
      %v507 = vadd.f32 %v340, %v506
      %v508 = vpop.f32.mrb[0].mxu0
      %509 = vmatprep.mubr.bf16.mxu0 0
      %510 = vmatmul.mubr.bf16.gmra.mrb[0].mxu0 %v380
      %v511 = vpop.f32.mrb[0].mxu0
      %v512 = vadd.f32 %v340, %v511
      %v513 = vpop.f32.mrb[0].mxu0
      %v514 = vpop.f32.mrb[0].mxu0
      %v515 = vadd.f32 %v340, %v514
      %v516 = vpop.f32.mrb[0].mxu0
      %517 = vmatprep.mubr.bf16.mxu0 0
      %518 = vmatmul.mubr.bf16.gmra.mrb[0].mxu0 %v383
      %v519 = vpop.f32.mrb[0].mxu0
      %v520 = vadd.f32 %v340, %v519
      %v521 = vpop.f32.mrb[0].mxu0
      %v522 = vpop.f32.mrb[0].mxu0
      %v523 = vadd.f32 %v340, %v522
      %v524 = vpop.f32.mrb[0].mxu0
      %525 = vmatprep.mubr.bf16.mxu0 0
      %526 = vmatmul.mubr.bf16.gmra.mrb[0].mxu0 %v386
      %v527 = vpop.f32.mrb[0].mxu0
      %v528 = vadd.f32 %v340, %v527
      %v529 = vpop.f32.mrb[0].mxu0
      %v530 = vpop.f32.mrb[0].mxu0
      %v531 = vadd.f32 %v340, %v530
      %v532 = vpop.f32.mrb[0].mxu0
      %533 = vmatprep.mubr.bf16.mxu0 0
      %534 = vmatmul.mubr.bf16.gmra.mrb[0].mxu0 %v389
      %v535 = vpop.f32.mrb[0].mxu0
      %v536 = vadd.f32 %v340, %v535
      %v537 = vpop.f32.mrb[0].mxu0
      %v538 = vpop.f32.mrb[0].mxu0
      %v539 = vadd.f32 %v340, %v538
      %v540 = vpop.f32.mrb[0].mxu0
      %541 = vmatprep.mubr.bf16.mxu0 0
      %542 = vmatmul.mubr.bf16.gmra.mrb[0].mxu0 %v392
      %v543 = vpop.f32.mrb[0].mxu0
      %v544 = vadd.f32 %v340, %v543
      %v545 = vpop.f32.mrb[0].mxu0
      %v546 = vpop.f32.mrb[0].mxu0
      %v547 = vadd.f32 %v340, %v546
      %v548 = vpop.f32.mrb[0].mxu0
      %549 = vmatprep.mubr.bf16.mxu0 0
      %550 = vmatmul.mubr.bf16.gmra.mrb[0].mxu0 %v395
      %v551 = vpop.f32.mrb[0].mxu0
      %v552 = vadd.f32 %v340, %v551
      %v553 = vpop.f32.mrb[0].mxu0
      %v554 = vpop.f32.mrb[0].mxu0
      %v555 = vadd.f32 %v340, %v554
      %v556 = vpop.f32.mrb[0].mxu0
      %557 = vdwg.mxu0
      %v558 = vmax.f32 %v432, 0.0
      %v559 = vmax.f32 %v435, 0.0
      %v560 = vmax.f32 %v440, 0.0
      %v561 = vmax.f32 %v443, 0.0
      %v562 = vmax.f32 %v448, 0.0
      %v563 = vmax.f32 %v451, 0.0
      %v564 = vmax.f32 %v456, 0.0
      %v565 = vmax.f32 %v459, 0.0
      %v566 = vmax.f32 %v464, 0.0
      %v567 = vmax.f32 %v467, 0.0
      %v568 = vmax.f32 %v472, 0.0
      %v569 = vmax.f32 %v475, 0.0
      %v570 = vmax.f32 %v480, 0.0
      %v571 = vmax.f32 %v483, 0.0
      %v572 = vmax.f32 %v488, 0.0
      %v573 = vmax.f32 %v491, 0.0
      %v574 = vmax.f32 %v496, 0.0
      %v575 = vmax.f32 %v499, 0.0
      %v576 = vmax.f32 %v504, 0.0
      %v577 = vmax.f32 %v507, 0.0
      %v578 = vmax.f32 %v512, 0.0
      %v579 = vmax.f32 %v515, 0.0
      %v580 = vmax.f32 %v520, 0.0
      %v581 = vmax.f32 %v523, 0.0
      %v582 = vmax.f32 %v528, 0.0
      %v583 = vmax.f32 %v531, 0.0
      %v584 = vmax.f32 %v536, 0.0
      %v585 = vmax.f32 %v539, 0.0
      %v586 = vmax.f32 %v544, 0.0
      %v587 = vmax.f32 %v547, 0.0
      %v588 = vmax.f32 %v552, 0.0
      %v589 = vmax.f32 %v555, 0.0
      %v590 = vpack.c.bf16 %v559, %v558
      %v591 = vpack.c.bf16 %v561, %v560
      %v592 = vpack.c.bf16 %v563, %v562
      %v593 = vpack.c.bf16 %v565, %v564
      %v594 = vpack.c.bf16 %v567, %v566
      %v595 = vpack.c.bf16 %v569, %v568
      %v596 = vpack.c.bf16 %v571, %v570
      %v597 = vpack.c.bf16 %v573, %v572
      %v598 = vpack.c.bf16 %v575, %v574
      %v599 = vpack.c.bf16 %v577, %v576
      %v600 = vpack.c.bf16 %v579, %v578
      %v601 = vpack.c.bf16 %v581, %v580
      %v602 = vpack.c.bf16 %v583, %v582
      %v603 = vpack.c.bf16 %v585, %v584
      %v604 = vpack.c.bf16 %v587, %v586
      %v605 = vpack.c.bf16 %v589, %v588
      %v606 = vld [vmem:[%s3] sm:$0xf]
      %v607 = vld [vmem:[%s3 + $0x4] sm:$0xf]
      %v608 = vld [vmem:[%s3 + $0x8] sm:$0xf]
      %v609 = vld [vmem:[%s3 + $0xc] sm:$0xf]
      %v610 = vld [vmem:[%s4] sm:$0x1]
      %v612 = vlaneseq
      %v613 = vshrl.u32 %v612, 7
      %v614 = vsub.s32 0, %v613
      %v615 = vrot.slane %v610, %v614
      %v621 = vunpack.c.l.b16 %v606
      %v622 = vunpack.c.l.b16 %v607
      %v623 = vunpack.c.l.b16 %v608
      %v624 = vunpack.c.l.b16 %v609
      %v625 = vpack.c.b16 %v622, %v621
      %v626 = vpack.c.b16 %v624, %v623
      %vm629 = vcmask 261120
      %v631 = vsel %vm629, %v590, 0
      %v634 = vsel %vm629, %v591, 0
      %v637 = vsel %vm629, %v592, 0
      %v640 = vsel %vm629, %v593, 0
      %v643 = vsel %vm629, %v594, 0
      %v646 = vsel %vm629, %v595, 0
      %v649 = vsel %vm629, %v596, 0
      %v652 = vsel %vm629, %v597, 0
      %v655 = vsel %vm629, %v598, 0
      %v658 = vsel %vm629, %v599, 0
      %v661 = vsel %vm629, %v600, 0
      %v664 = vsel %vm629, %v601, 0
      %v667 = vsel %vm629, %v602, 0
      %v670 = vsel %vm629, %v603, 0
      %v673 = vsel %vm629, %v604, 0
      %v676 = vsel %vm629, %v605, 0
      %678 = vmatprep.subr.bf16.mxu0 0
      %679 = vmatpush1.bf16.msra.mxu0 %v625
      %680 = vmatprep.subr.bf16.mxu0 0
      %681 = vmatpush1.bf16.msra.mxu0 %v626
      %682 = vmatprep.subr.bf16.mxu0 0
      %683 = vmatpush1.bf16.msra.mxu0 0
      %684 = vmatprep.subr.bf16.mxu0 0
      %685 = vmatpush1.bf16.msra.mxu0 0
      %686 = vmatprep.subr.bf16.mxu0 0
      %687 = vmatpush1.bf16.msra.mxu0 0
      %688 = vmatprep.subr.bf16.mxu0 0
      %689 = vmatpush1.bf16.msra.mxu0 0
      %690 = vmatprep.subr.bf16.mxu0 0
      %691 = vmatpush1.bf16.msra.mxu0 0
      %692 = vmatprep.subr.bf16.mxu0 0
      %693 = vmatpush1.bf16.msra.mxu0 0
      %694 = vmatprep.subr.bf16.mxu0 0
      %695 = vmatpush1.bf16.msra.mxu0 0
      %696 = vmatprep.subr.bf16.mxu0 0
      %697 = vmatpush1.bf16.msra.mxu0 0
      %698 = vmatprep.subr.bf16.mxu0 0
      %699 = vmatpush1.bf16.msra.mxu0 0
      %700 = vmatprep.subr.bf16.mxu0 0
      %701 = vmatpush1.bf16.msra.mxu0 0
      %702 = vmatprep.subr.bf16.mxu0 0
      %703 = vmatpush1.bf16.msra.mxu0 0
      %704 = vmatprep.subr.bf16.mxu0 0
      %705 = vmatpush1.bf16.msra.mxu0 0
      %706 = vmatprep.subr.bf16.mxu0 0
      %707 = vmatpush1.bf16.msra.mxu0 0
      %708 = vmatprep.subr.bf16.mxu0 0
      %709 = vmatpush1.bf16.msra.mxu0 0
      %710 = vmatprep.mubr.bf16.mxu0 0
      %711 = vmatmul.mubr.bf16.gmra.mrb[0].mxu0 %v631
      %v712 = vpop.f32.mrb[0].mxu0
      %v713 = vadd.f32 %v615, %v712
      %v714 = vpop.f32.mrb[0].mxu0
      %v715 = vpop.f32.mrb[0].mxu0
      %v716 = vadd.f32 %v615, %v715
      %v717 = vpop.f32.mrb[0].mxu0
      %718 = vmatprep.mubr.bf16.mxu0 0
      %719 = vmatmul.mubr.bf16.gmra.mrb[0].mxu0 %v634
      %v720 = vpop.f32.mrb[0].mxu0
      %v721 = vadd.f32 %v615, %v720
      %v722 = vpop.f32.mrb[0].mxu0
      %v723 = vpop.f32.mrb[0].mxu0
      %v724 = vadd.f32 %v615, %v723
      %v725 = vpop.f32.mrb[0].mxu0
      %726 = vmatprep.mubr.bf16.mxu0 0
      %727 = vmatmul.mubr.bf16.gmra.mrb[0].mxu0 %v637
      %v728 = vpop.f32.mrb[0].mxu0
      %v729 = vadd.f32 %v615, %v728
      %v730 = vpop.f32.mrb[0].mxu0
      %v731 = vpop.f32.mrb[0].mxu0
      %v732 = vadd.f32 %v615, %v731
      %v733 = vpop.f32.mrb[0].mxu0
      %734 = vmatprep.mubr.bf16.mxu0 0
      %735 = vmatmul.mubr.bf16.gmra.mrb[0].mxu0 %v640
      %v736 = vpop.f32.mrb[0].mxu0
      %v737 = vadd.f32 %v615, %v736
      %v738 = vpop.f32.mrb[0].mxu0
      %v739 = vpop.f32.mrb[0].mxu0
      %v740 = vadd.f32 %v615, %v739
      %v741 = vpop.f32.mrb[0].mxu0
      %742 = vmatprep.mubr.bf16.mxu0 0
      %743 = vmatmul.mubr.bf16.gmra.mrb[0].mxu0 %v643
      %v744 = vpop.f32.mrb[0].mxu0
      %v745 = vadd.f32 %v615, %v744
      %v746 = vpop.f32.mrb[0].mxu0
      %v747 = vpop.f32.mrb[0].mxu0
      %v748 = vadd.f32 %v615, %v747
      %v749 = vpop.f32.mrb[0].mxu0
      %750 = vmatprep.mubr.bf16.mxu0 0
      %751 = vmatmul.mubr.bf16.gmra.mrb[0].mxu0 %v646
      %v752 = vpop.f32.mrb[0].mxu0
      %v753 = vadd.f32 %v615, %v752
      %v754 = vpop.f32.mrb[0].mxu0
      %v755 = vpop.f32.mrb[0].mxu0
      %v756 = vadd.f32 %v615, %v755
      %v757 = vpop.f32.mrb[0].mxu0
      %758 = vmatprep.mubr.bf16.mxu0 0
      %759 = vmatmul.mubr.bf16.gmra.mrb[0].mxu0 %v649
      %v760 = vpop.f32.mrb[0].mxu0
      %v761 = vadd.f32 %v615, %v760
      %v762 = vpop.f32.mrb[0].mxu0
      %v763 = vpop.f32.mrb[0].mxu0
      %v764 = vadd.f32 %v615, %v763
      %v765 = vpop.f32.mrb[0].mxu0
      %766 = vmatprep.mubr.bf16.mxu0 0
      %767 = vmatmul.mubr.bf16.gmra.mrb[0].mxu0 %v652
      %v768 = vpop.f32.mrb[0].mxu0
      %v769 = vadd.f32 %v615, %v768
      %v770 = vpop.f32.mrb[0].mxu0
      %v771 = vpop.f32.mrb[0].mxu0
      %v772 = vadd.f32 %v615, %v771
      %v773 = vpop.f32.mrb[0].mxu0
      %774 = vmatprep.mubr.bf16.mxu0 0
      %775 = vmatmul.mubr.bf16.gmra.mrb[0].mxu0 %v655
      %v776 = vpop.f32.mrb[0].mxu0
      %v777 = vadd.f32 %v615, %v776
      %v778 = vpop.f32.mrb[0].mxu0
      %v779 = vpop.f32.mrb[0].mxu0
      %v780 = vadd.f32 %v615, %v779
      %v781 = vpop.f32.mrb[0].mxu0
      %782 = vmatprep.mubr.bf16.mxu0 0
      %783 = vmatmul.mubr.bf16.gmra.mrb[0].mxu0 %v658
      %v784 = vpop.f32.mrb[0].mxu0
      %v785 = vadd.f32 %v615, %v784
      %v786 = vpop.f32.mrb[0].mxu0
      %v787 = vpop.f32.mrb[0].mxu0
      %v788 = vadd.f32 %v615, %v787
      %v789 = vpop.f32.mrb[0].mxu0
      %790 = vmatprep.mubr.bf16.mxu0 0
      %791 = vmatmul.mubr.bf16.gmra.mrb[0].mxu0 %v661
      %v792 = vpop.f32.mrb[0].mxu0
      %v793 = vadd.f32 %v615, %v792
      %v794 = vpop.f32.mrb[0].mxu0
      %v795 = vpop.f32.mrb[0].mxu0
      %v796 = vadd.f32 %v615, %v795
      %v797 = vpop.f32.mrb[0].mxu0
      %798 = vmatprep.mubr.bf16.mxu0 0
      %799 = vmatmul.mubr.bf16.gmra.mrb[0].mxu0 %v664
      %v800 = vpop.f32.mrb[0].mxu0
      %v801 = vadd.f32 %v615, %v800
      %v802 = vpop.f32.mrb[0].mxu0
      %v803 = vpop.f32.mrb[0].mxu0
      %v804 = vadd.f32 %v615, %v803
      %v805 = vpop.f32.mrb[0].mxu0
      %806 = vmatprep.mubr.bf16.mxu0 0
      %807 = vmatmul.mubr.bf16.gmra.mrb[0].mxu0 %v667
      %v808 = vpop.f32.mrb[0].mxu0
      %v809 = vadd.f32 %v615, %v808
      %v810 = vpop.f32.mrb[0].mxu0
      %v811 = vpop.f32.mrb[0].mxu0
      %v812 = vadd.f32 %v615, %v811
      %v813 = vpop.f32.mrb[0].mxu0
      %814 = vmatprep.mubr.bf16.mxu0 0
      %815 = vmatmul.mubr.bf16.gmra.mrb[0].mxu0 %v670
      %v816 = vpop.f32.mrb[0].mxu0
      %v817 = vadd.f32 %v615, %v816
      %v818 = vpop.f32.mrb[0].mxu0
      %v819 = vpop.f32.mrb[0].mxu0
      %v820 = vadd.f32 %v615, %v819
      %v821 = vpop.f32.mrb[0].mxu0
      %822 = vmatprep.mubr.bf16.mxu0 0
      %823 = vmatmul.mubr.bf16.gmra.mrb[0].mxu0 %v673
      %v824 = vpop.f32.mrb[0].mxu0
      %v825 = vadd.f32 %v615, %v824
      %v826 = vpop.f32.mrb[0].mxu0
      %v827 = vpop.f32.mrb[0].mxu0
      %v828 = vadd.f32 %v615, %v827
      %v829 = vpop.f32.mrb[0].mxu0
      %830 = vmatprep.mubr.bf16.mxu0 0
      %831 = vmatmul.mubr.bf16.gmra.mrb[0].mxu0 %v676
      %v832 = vpop.f32.mrb[0].mxu0
      %v833 = vadd.f32 %v615, %v832
      %v834 = vpop.f32.mrb[0].mxu0
      %v835 = vpop.f32.mrb[0].mxu0
      %v836 = vadd.f32 %v615, %v835
      %v837 = vpop.f32.mrb[0].mxu0
      %838 = vdwg.mxu0
      %v839 = vmax.f32 %v713, 0.0
      %v840 = vmax.f32 %v716, 0.0
      %v841 = vmax.f32 %v721, 0.0
      %v842 = vmax.f32 %v724, 0.0
      %v843 = vmax.f32 %v729, 0.0
      %v844 = vmax.f32 %v732, 0.0
      %v845 = vmax.f32 %v737, 0.0
      %v846 = vmax.f32 %v740, 0.0
      %v847 = vmax.f32 %v745, 0.0
      %v848 = vmax.f32 %v748, 0.0
      %v849 = vmax.f32 %v753, 0.0
      %v850 = vmax.f32 %v756, 0.0
      %v851 = vmax.f32 %v761, 0.0
      %v852 = vmax.f32 %v764, 0.0
      %v853 = vmax.f32 %v769, 0.0
      %v854 = vmax.f32 %v772, 0.0
      %v855 = vmax.f32 %v777, 0.0
      %v856 = vmax.f32 %v780, 0.0
      %v857 = vmax.f32 %v785, 0.0
      %v858 = vmax.f32 %v788, 0.0
      %v859 = vmax.f32 %v793, 0.0
      %v860 = vmax.f32 %v796, 0.0
      %v861 = vmax.f32 %v801, 0.0
      %v862 = vmax.f32 %v804, 0.0
      %v863 = vmax.f32 %v809, 0.0
      %v864 = vmax.f32 %v812, 0.0
      %v865 = vmax.f32 %v817, 0.0
      %v866 = vmax.f32 %v820, 0.0
      %v867 = vmax.f32 %v825, 0.0
      %v868 = vmax.f32 %v828, 0.0
      %v869 = vmax.f32 %v833, 0.0
      %v870 = vmax.f32 %v836, 0.0
      %v871 = vld [vmem:[%s5] sm:$0x1]
      %v873 = vlaneseq
      %v874 = vshrl.u32 %v873, 7
      %v875 = vsub.s32 0, %v874
      %v876 = vrot.slane %v871, %v875
      %v878 = vmul.f32 %v839, %v876
      %v879 = vmul.f32 %v840, %v876
      %v880 = vmul.f32 %v841, %v876
      %v881 = vmul.f32 %v842, %v876
      %v882 = vmul.f32 %v843, %v876
      %v883 = vmul.f32 %v844, %v876
      %v884 = vmul.f32 %v845, %v876
      %v885 = vmul.f32 %v846, %v876
      %v886 = vmul.f32 %v847, %v876
      %v887 = vmul.f32 %v848, %v876
      %v888 = vmul.f32 %v849, %v876
      %v889 = vmul.f32 %v850, %v876
      %v890 = vmul.f32 %v851, %v876
      %v891 = vmul.f32 %v852, %v876
      %v892 = vmul.f32 %v853, %v876
      %v893 = vmul.f32 %v854, %v876
      %v894 = vmul.f32 %v855, %v876
      %v895 = vmul.f32 %v856, %v876
      %v896 = vmul.f32 %v857, %v876
      %v897 = vmul.f32 %v858, %v876
      %v898 = vmul.f32 %v859, %v876
      %v899 = vmul.f32 %v860, %v876
      %v900 = vmul.f32 %v861, %v876
      %v901 = vmul.f32 %v862, %v876
      %v902 = vmul.f32 %v863, %v876
      %v903 = vmul.f32 %v864, %v876
      %v904 = vmul.f32 %v865, %v876
      %v905 = vmul.f32 %v866, %v876
      %v906 = vmul.f32 %v867, %v876
      %v907 = vmul.f32 %v868, %v876
      %v908 = vmul.f32 %v869, %v876
      %v909 = vmul.f32 %v870, %v876
      %v910 = vsel %vm629, %v878, 0.0
      %911 = vadd.xlane.f32.xlu0 %v910
      %v912 = vpop.xlane.xlu0 %911
      %v913 = vsel %vm629, %v879, 0.0
      %914 = vadd.xlane.f32.xlu0 %v913
      %v915 = vpop.xlane.xlu0 %914
      %v916 = vsel %vm629, %v880, 0.0
      %917 = vadd.xlane.f32.xlu0 %v916
      %v918 = vpop.xlane.xlu0 %917
      %v919 = vsel %vm629, %v881, 0.0
      %920 = vadd.xlane.f32.xlu0 %v919
      %v921 = vpop.xlane.xlu0 %920
      %v922 = vsel %vm629, %v882, 0.0
      %923 = vadd.xlane.f32.xlu0 %v922
      %v924 = vpop.xlane.xlu0 %923
      %v925 = vsel %vm629, %v883, 0.0
      %926 = vadd.xlane.f32.xlu0 %v925
      %v927 = vpop.xlane.xlu0 %926
      %v928 = vsel %vm629, %v884, 0.0
      %929 = vadd.xlane.f32.xlu0 %v928
      %v930 = vpop.xlane.xlu0 %929
      %v931 = vsel %vm629, %v885, 0.0
      %932 = vadd.xlane.f32.xlu0 %v931
      %v933 = vpop.xlane.xlu0 %932
      %v934 = vsel %vm629, %v886, 0.0
      %935 = vadd.xlane.f32.xlu0 %v934
      %v936 = vpop.xlane.xlu0 %935
      %v937 = vsel %vm629, %v887, 0.0
      %938 = vadd.xlane.f32.xlu0 %v937
      %v939 = vpop.xlane.xlu0 %938
      %v940 = vsel %vm629, %v888, 0.0
      %941 = vadd.xlane.f32.xlu0 %v940
      %v942 = vpop.xlane.xlu0 %941
      %v943 = vsel %vm629, %v889, 0.0
      %944 = vadd.xlane.f32.xlu0 %v943
      %v945 = vpop.xlane.xlu0 %944
      %v946 = vsel %vm629, %v890, 0.0
      %947 = vadd.xlane.f32.xlu0 %v946
      %v948 = vpop.xlane.xlu0 %947
      %v949 = vsel %vm629, %v891, 0.0
      %950 = vadd.xlane.f32.xlu0 %v949
      %v951 = vpop.xlane.xlu0 %950
      %v952 = vsel %vm629, %v892, 0.0
      %953 = vadd.xlane.f32.xlu0 %v952
      %v954 = vpop.xlane.xlu0 %953
      %v955 = vsel %vm629, %v893, 0.0
      %956 = vadd.xlane.f32.xlu0 %v955
      %v957 = vpop.xlane.xlu0 %956
      %v958 = vsel %vm629, %v894, 0.0
      %959 = vadd.xlane.f32.xlu0 %v958
      %v960 = vpop.xlane.xlu0 %959
      %v961 = vsel %vm629, %v895, 0.0
      %962 = vadd.xlane.f32.xlu0 %v961
      %v963 = vpop.xlane.xlu0 %962
      %v964 = vsel %vm629, %v896, 0.0
      %965 = vadd.xlane.f32.xlu0 %v964
      %v966 = vpop.xlane.xlu0 %965
      %v967 = vsel %vm629, %v897, 0.0
      %968 = vadd.xlane.f32.xlu0 %v967
      %v969 = vpop.xlane.xlu0 %968
      %v970 = vsel %vm629, %v898, 0.0
      %971 = vadd.xlane.f32.xlu0 %v970
      %v972 = vpop.xlane.xlu0 %971
      %v973 = vsel %vm629, %v899, 0.0
      %974 = vadd.xlane.f32.xlu0 %v973
      %v975 = vpop.xlane.xlu0 %974
      %v976 = vsel %vm629, %v900, 0.0
      %977 = vadd.xlane.f32.xlu0 %v976
      %v978 = vpop.xlane.xlu0 %977
      %v979 = vsel %vm629, %v901, 0.0
      %980 = vadd.xlane.f32.xlu0 %v979
      %v981 = vpop.xlane.xlu0 %980
      %v982 = vsel %vm629, %v902, 0.0
      %983 = vadd.xlane.f32.xlu0 %v982
      %v984 = vpop.xlane.xlu0 %983
      %v985 = vsel %vm629, %v903, 0.0
      %986 = vadd.xlane.f32.xlu0 %v985
      %v987 = vpop.xlane.xlu0 %986
      %v988 = vsel %vm629, %v904, 0.0
      %989 = vadd.xlane.f32.xlu0 %v988
      %v990 = vpop.xlane.xlu0 %989
      %v991 = vsel %vm629, %v905, 0.0
      %992 = vadd.xlane.f32.xlu0 %v991
      %v993 = vpop.xlane.xlu0 %992
      %v994 = vsel %vm629, %v906, 0.0
      %995 = vadd.xlane.f32.xlu0 %v994
      %v996 = vpop.xlane.xlu0 %995
      %v997 = vsel %vm629, %v907, 0.0
      %998 = vadd.xlane.f32.xlu0 %v997
      %v999 = vpop.xlane.xlu0 %998
      %v1000 = vsel %vm629, %v908, 0.0
      %1001 = vadd.xlane.f32.xlu0 %v1000
      %v1002 = vpop.xlane.xlu0 %1001
      %v1003 = vsel %vm629, %v909, 0.0
      %1004 = vadd.xlane.f32.xlu0 %v1003
      %v1005 = vpop.xlane.xlu0 %1004
      %v1006 = vld [vmem:[#allocation2] sm:$0x1]
      %v1008 = vlaneseq
      %v1009 = vshrl.u32 %v1008, 7
      %v1010 = vsub.s32 0, %v1009
      %v1011 = vrot.slane %v1006, %v1010
      %v1013 = vadd.f32 %v912, %v1011
      %v1014 = vadd.f32 %v915, %v1011
      %v1015 = vadd.f32 %v918, %v1011
      %v1016 = vadd.f32 %v921, %v1011
      %v1017 = vadd.f32 %v924, %v1011
      %v1018 = vadd.f32 %v927, %v1011
      %v1019 = vadd.f32 %v930, %v1011
      %v1020 = vadd.f32 %v933, %v1011
      %v1021 = vadd.f32 %v936, %v1011
      %v1022 = vadd.f32 %v939, %v1011
      %v1023 = vadd.f32 %v942, %v1011
      %v1024 = vadd.f32 %v945, %v1011
      %v1025 = vadd.f32 %v948, %v1011
      %v1026 = vadd.f32 %v951, %v1011
      %v1027 = vadd.f32 %v954, %v1011
      %v1028 = vadd.f32 %v957, %v1011
      %v1029 = vadd.f32 %v960, %v1011
      %v1030 = vadd.f32 %v963, %v1011
      %v1031 = vadd.f32 %v966, %v1011
      %v1032 = vadd.f32 %v969, %v1011
      %v1033 = vadd.f32 %v972, %v1011
      %v1034 = vadd.f32 %v975, %v1011
      %v1035 = vadd.f32 %v978, %v1011
      %v1036 = vadd.f32 %v981, %v1011
      %v1037 = vadd.f32 %v984, %v1011
      %v1038 = vadd.f32 %v987, %v1011
      %v1039 = vadd.f32 %v990, %v1011
      %v1040 = vadd.f32 %v993, %v1011
      %v1041 = vadd.f32 %v996, %v1011
      %v1042 = vadd.f32 %v999, %v1011
      %v1043 = vadd.f32 %v1002, %v1011
      %v1044 = vadd.f32 %v1005, %v1011
      %vm1045 = vcmask 7168
      %1046 = vst.msk [vmem:[%s282] sm:$0xff] %vm1045, %v1013
      %1047 = vst.msk [vmem:[%s282 + $0x8] sm:$0xff] %vm1045, %v1014
      %1048 = vst.msk [vmem:[%s282 + $0x10] sm:$0xff] %vm1045, %v1015
      %1049 = vst.msk [vmem:[%s282 + $0x18] sm:$0xff] %vm1045, %v1016
      %1050 = vst.msk [vmem:[%s282 + $0x20] sm:$0xff] %vm1045, %v1017
      %1051 = vst.msk [vmem:[%s282 + $0x28] sm:$0xff] %vm1045, %v1018
      %1052 = vst.msk [vmem:[%s282 + $0x30] sm:$0xff] %vm1045, %v1019
      %1053 = vst.msk [vmem:[%s282 + $0x38] sm:$0xff] %vm1045, %v1020
      %1054 = vst.msk [vmem:[%s282 + $0x40] sm:$0xff] %vm1045, %v1021
      %1055 = vst.msk [vmem:[%s282 + $0x48] sm:$0xff] %vm1045, %v1022
      %1056 = vst.msk [vmem:[%s282 + $0x50] sm:$0xff] %vm1045, %v1023
      %1057 = vst.msk [vmem:[%s282 + $0x58] sm:$0xff] %vm1045, %v1024
      %1058 = vst.msk [vmem:[%s282 + $0x60] sm:$0xff] %vm1045, %v1025
      %1059 = vst.msk [vmem:[%s282 + $0x68] sm:$0xff] %vm1045, %v1026
      %1060 = vst.msk [vmem:[%s282 + $0x70] sm:$0xff] %vm1045, %v1027
      %1061 = vst.msk [vmem:[%s282 + $0x78] sm:$0xff] %vm1045, %v1028
      %1062 = vst.msk [vmem:[%s282 + $0x80] sm:$0xff] %vm1045, %v1029
      %1063 = vst.msk [vmem:[%s282 + $0x88] sm:$0xff] %vm1045, %v1030
      %1064 = vst.msk [vmem:[%s282 + $0x90] sm:$0xff] %vm1045, %v1031
      %1065 = vst.msk [vmem:[%s282 + $0x98] sm:$0xff] %vm1045, %v1032
      %1066 = vst.msk [vmem:[%s282 + $0xa0] sm:$0xff] %vm1045, %v1033
      %1067 = vst.msk [vmem:[%s282 + $0xa8] sm:$0xff] %vm1045, %v1034
      %1068 = vst.msk [vmem:[%s282 + $0xb0] sm:$0xff] %vm1045, %v1035
      %1069 = vst.msk [vmem:[%s282 + $0xb8] sm:$0xff] %vm1045, %v1036
      %1070 = vst.msk [vmem:[%s282 + $0xc0] sm:$0xff] %vm1045, %v1037
      %1071 = vst.msk [vmem:[%s282 + $0xc8] sm:$0xff] %vm1045, %v1038
      %1072 = vst.msk [vmem:[%s282 + $0xd0] sm:$0xff] %vm1045, %v1039
      %1073 = vst.msk [vmem:[%s282 + $0xd8] sm:$0xff] %vm1045, %v1040
      %1074 = vst.msk [vmem:[%s282 + $0xe0] sm:$0xff] %vm1045, %v1041
      %1075 = vst.msk [vmem:[%s282 + $0xe8] sm:$0xff] %vm1045, %v1042
      %1076 = vst.msk [vmem:[%s282 + $0xf0] sm:$0xff] %vm1045, %v1043
      %1077 = vst.msk [vmem:[%s282 + $0xf8] sm:$0xff] %vm1045, %v1044
      %s1078 = smul.u32 32, %s20
      %p1079 = scmp.lt.s32.totalorder %s1078, 63
      %s1080 = scalar_select %p1079, %s1078, 63
      %s1081 = smul.addr %s1080, 8
      %s1082 = scalar_lea.vmem %s7, %s1081
      // Predicated region
      $region49: #{tpu_custom_call.1} parent=47 // pred_check
        %p1083 = pneg %p190
      $region50: #{tpu_custom_call.1} parent=47 // pred_check_branch
        %1085 = sbr.rel (%p1083) target = $region52
      $region51: #{tpu_custom_call.1} parent=47 // pred_region
        %s1086 = smul.u32 32, %s20
      $region52: #{tpu_custom_call.1} parent=47 // pred_fallthru
        _
    $region48: #{tpu_custom_call.1} parent=5 // pred_fallthru
      _
    %p1087 = scmp.le.s32.totalorder 2, %s15
    // Predicated region
    $region53: #{tpu_custom_call.1} parent=5 // pred_check
      %p1088 = pneg %p1087
    $region54: #{tpu_custom_call.1} parent=5 // pred_check_branch
      %1090 = sbr.rel (%p1088) target = $region56
    $region55: #{tpu_custom_call.1} parent=5 // pred_region
      %s1091 = ssub.s32 %s15, 2
      // Predicated region
      $region57: #{tpu_custom_call.1} parent=55 // pred_check
        %p1092 = pneg %p196
      $region58: #{tpu_custom_call.1} parent=55 // pred_check_branch
        %1094 = sbr.rel (%p1092) target = $region60
      $region59: #{tpu_custom_call.1} parent=55 // pred_region
        %s1095 = smul.u32 32, %s21
        %p1096 = scmp.lt.s32.totalorder %s1095, 63
        %s1097 = scalar_select %p1096, %s1095, 63
        %s1098 = smul.addr %s1097, 8
        %s1099 = scalar_lea.vmem %s7, %s1098
      $region60: #{tpu_custom_call.1} parent=55 // pred_fallthru
        _
    $region56: #{tpu_custom_call.1} parent=5 // pred_fallthru
      _
  $region6: #{tpu_custom_call.1} parent=0 // loop_footer
    %s19 = sadd.s32 1, %s15
  $region7: #{tpu_custom_call.1} parent=0 // loop_footer_branch
    %14 = sbr.rel target = $region3
  $region8: #{tpu_custom_call.1} parent=0 // loop_exit
    _

// kernel: tpu_custom_call.1
$region0: #{tpu_custom_call.1}
  #allocation0 [shape = 'u32[]', space=smem, size = 0x4, offset = 0x4, fixed_abs, tag = 'smem constant byte address 0x4 - core index']
  #allocation1 [shape = 'u32[144,128]{1,0:T(1,128)}', space=vmem, size = 0x12000, scoped, tag = 'internal scratch']
  #allocation2 [shape = 'f32[1,1]{1,0:T(1,128)S(1)}', space=vmem, size = 0x200, scoped, tag = 'scoped memory for tpu_custom_call.1']
  %s0 = inlined_call_operand.vmem [shape: f32[512,16], index: 0, kind: input, shape index: {}]
  %s1 = inlined_call_operand.vmem [shape: bf16[16,32], index: 1, kind: input, shape index: {}]
  %s2 = inlined_call_operand.vmem [shape: f32[1,32], index: 2, kind: input, shape index: {}]
  %s3 = inlined_call_operand.vmem [shape: bf16[32,32], index: 3, kind: input, shape index: {}]
  %s4 = inlined_call_operand.vmem [shape: f32[1,32], index: 4, kind: input, shape index: {}]
  %s5 = inlined_call_operand.vmem [shape: f32[1,32], index: 5, kind: input, shape index: {}]
  %s6 = inlined_call_operand.<no memory space> [shape: f32[1,1], index: 6, kind: input, shape index: {}]
  %s7 = inlined_call_operand.vmem [shape: f32[512,1], index: 7, kind: output, shape index: {}]
  %s8 = sld [smem:[#allocation0]]
  $region61: #{tpu_custom_call.1} parent=0
    _
  %s10 = ssub.s32 1, %s8
  %s11 = scalar_select 0, %s10, %s8
  %v12 = vstv %s6
  %13 = vst [vmem:[#allocation2] sm:$0x1] %v12
  loop: start=0, step=1, limit=4
  $region2: #{tpu_custom_call.1} parent=0 // loop_pre_header
    _
  $region3: #{tpu_custom_call.1} parent=0 // loop_header
    %s15 = sphi 0, %s19
    %p16 = scmp.ge.s32.totalorder %s15, 4
    %s25 = sphi 0, %s27
    %s28 = sphi 0, %s25
    %s29 = sphi 0, %s28
    %s45 = sphi 0, %s29
    %s49 = sphi 0, %s49
    %s51 = sphi 0, %s49
    %s52 = sphi 0, %s51
    %s66 = sphi 0, %s52
    %s70 = sphi 0, %s70
    %s72 = sphi 0, %s70
    %s73 = sphi 0, %s72
    %s87 = sphi 0, %s73
    %s91 = sphi 0, %s91
    %s93 = sphi 0, %s91
    %s94 = sphi 0, %s93
    %s108 = sphi 0, %s94
    %s112 = sphi 0, %s112
    %s114 = sphi 0, %s112
    %s115 = sphi 0, %s114
    %s129 = sphi 0, %s115
    %s133 = sphi 0, %s133
    %s135 = sphi 0, %s133
    %s136 = sphi 0, %s135
    %s150 = sphi 0, %s136
    %s154 = sphi 0, %s154
    %s156 = sphi 0, %s154
    %s157 = sphi 0, %s156
    %s171 = sphi 0, %s157
    %s177 = sphi 0, %s179
    %s180 = sphi 0, %s177
    %s181 = sphi 0, %s180
    %s197 = sphi 0, %s181
  $region4: #{tpu_custom_call.1} parent=0 // loop_header_branch
    %18 = sbr.rel (%p16) target = $region8
  $region5: #{tpu_custom_call.1} parent=0 // loop_body
    %s20 = ssub.s32 %s15, 1
    %s21 = ssub.s32 %s15, 2
    %s22 = sadd.s32 %s15, 1
    %s23 = ssub.s32 %s15, %s22
    %p24 = scmp.eq.s32.totalorder %s23, 0
    %s26 = sadd.s32 %s25, 1
    %s27 = scalar_select %p24, %s25, %s26
    %p30 = pneg %p24
    %p31 = scmp.eq.s32.totalorder %s15, 1
    %p32 = por %p30, %p31
    %p33 = scmp.ne.s32.totalorder %s25, %s28
    %p34 = scmp.eq.s32.totalorder %s15, 0
    %p35 = por %p33, %p34
    %p36 = scmp.ne.s32.totalorder %s25, %s28
    %p37 = scmp.eq.s32.totalorder %s20, 1
    %p38 = por %p36, %p37
    %p39 = scmp.ne.s32.totalorder %s28, %s29
    %p40 = scmp.eq.s32.totalorder %s20, 0
    %p41 = por %p39, %p40
    %p42 = scmp.ne.s32.totalorder %s28, %s29
    %p43 = scmp.eq.s32.totalorder %s21, 1
    %p44 = por %p42, %p43
    %p46 = scmp.ne.s32.totalorder %s29, %s45
    %p47 = scmp.eq.s32.totalorder %s21, 0
    %p48 = por %p46, %p47
    %s50 = sadd.s32 %s49, 1
    %p53 = scmp.eq.s32.totalorder %s15, 1
    %p54 = scmp.ne.s32.totalorder %s49, %s51
    %p55 = scmp.eq.s32.totalorder %s15, 0
    %p56 = por %p54, %p55
    %p57 = scmp.ne.s32.totalorder %s49, %s51
    %p58 = scmp.eq.s32.totalorder %s20, 1
    %p59 = por %p57, %p58
    %p60 = scmp.ne.s32.totalorder %s51, %s52
    %p61 = scmp.eq.s32.totalorder %s20, 0
    %p62 = por %p60, %p61
    %p63 = scmp.ne.s32.totalorder %s51, %s52
    %p64 = scmp.eq.s32.totalorder %s21, 1
    %p65 = por %p63, %p64
    %p67 = scmp.ne.s32.totalorder %s52, %s66
    %p68 = scmp.eq.s32.totalorder %s21, 0
    %p69 = por %p67, %p68
    %s71 = sadd.s32 %s70, 1
    %p74 = scmp.eq.s32.totalorder %s15, 1
    %p75 = scmp.ne.s32.totalorder %s70, %s72
    %p76 = scmp.eq.s32.totalorder %s15, 0
    %p77 = por %p75, %p76
    %p78 = scmp.ne.s32.totalorder %s70, %s72
    %p79 = scmp.eq.s32.totalorder %s20, 1
    %p80 = por %p78, %p79
    %p81 = scmp.ne.s32.totalorder %s72, %s73
    %p82 = scmp.eq.s32.totalorder %s20, 0
    %p83 = por %p81, %p82
    %p84 = scmp.ne.s32.totalorder %s72, %s73
    %p85 = scmp.eq.s32.totalorder %s21, 1
    %p86 = por %p84, %p85
    %p88 = scmp.ne.s32.totalorder %s73, %s87
    %p89 = scmp.eq.s32.totalorder %s21, 0
    %p90 = por %p88, %p89
    %s92 = sadd.s32 %s91, 1
    %p95 = scmp.eq.s32.totalorder %s15, 1
    %p96 = scmp.ne.s32.totalorder %s91, %s93
    %p97 = scmp.eq.s32.totalorder %s15, 0
    %p98 = por %p96, %p97
    %p99 = scmp.ne.s32.totalorder %s91, %s93
    %p100 = scmp.eq.s32.totalorder %s20, 1
    %p101 = por %p99, %p100
    %p102 = scmp.ne.s32.totalorder %s93, %s94
    %p103 = scmp.eq.s32.totalorder %s20, 0
    %p104 = por %p102, %p103
    %p105 = scmp.ne.s32.totalorder %s93, %s94
    %p106 = scmp.eq.s32.totalorder %s21, 1
    %p107 = por %p105, %p106
    %p109 = scmp.ne.s32.totalorder %s94, %s108
    %p110 = scmp.eq.s32.totalorder %s21, 0
    %p111 = por %p109, %p110
    %s113 = sadd.s32 %s112, 1
    %p116 = scmp.eq.s32.totalorder %s15, 1
    %p117 = scmp.ne.s32.totalorder %s112, %s114
    %p118 = scmp.eq.s32.totalorder %s15, 0
    %p119 = por %p117, %p118
    %p120 = scmp.ne.s32.totalorder %s112, %s114
    %p121 = scmp.eq.s32.totalorder %s20, 1
    %p122 = por %p120, %p121
    %p123 = scmp.ne.s32.totalorder %s114, %s115
    %p124 = scmp.eq.s32.totalorder %s20, 0
    %p125 = por %p123, %p124
    %p126 = scmp.ne.s32.totalorder %s114, %s115
    %p127 = scmp.eq.s32.totalorder %s21, 1
    %p128 = por %p126, %p127
    %p130 = scmp.ne.s32.totalorder %s115, %s129
    %p131 = scmp.eq.s32.totalorder %s21, 0
    %p132 = por %p130, %p131
    %s134 = sadd.s32 %s133, 1
    %p137 = scmp.eq.s32.totalorder %s15, 1
    %p138 = scmp.ne.s32.totalorder %s133, %s135
    %p139 = scmp.eq.s32.totalorder %s15, 0
    %p140 = por %p138, %p139
    %p141 = scmp.ne.s32.totalorder %s133, %s135
    %p142 = scmp.eq.s32.totalorder %s20, 1
    %p143 = por %p141, %p142
    %p144 = scmp.ne.s32.totalorder %s135, %s136
    %p145 = scmp.eq.s32.totalorder %s20, 0
    %p146 = por %p144, %p145
    %p147 = scmp.ne.s32.totalorder %s135, %s136
    %p148 = scmp.eq.s32.totalorder %s21, 1
    %p149 = por %p147, %p148
    %p151 = scmp.ne.s32.totalorder %s136, %s150
    %p152 = scmp.eq.s32.totalorder %s21, 0
    %p153 = por %p151, %p152
    %s155 = sadd.s32 %s154, 1
    %p158 = scmp.eq.s32.totalorder %s15, 1
    %p159 = scmp.ne.s32.totalorder %s154, %s156
    %p160 = scmp.eq.s32.totalorder %s15, 0
    %p161 = por %p159, %p160
    %p162 = scmp.ne.s32.totalorder %s154, %s156
    %p163 = scmp.eq.s32.totalorder %s20, 1
    %p164 = por %p162, %p163
    %p165 = scmp.ne.s32.totalorder %s156, %s157
    %p166 = scmp.eq.s32.totalorder %s20, 0
    %p167 = por %p165, %p166
    %p168 = scmp.ne.s32.totalorder %s156, %s157
    %p169 = scmp.eq.s32.totalorder %s21, 1
    %p170 = por %p168, %p169
    %p172 = scmp.ne.s32.totalorder %s157, %s171
    %p173 = scmp.eq.s32.totalorder %s21, 0
    %p174 = por %p172, %p173
    %s175 = ssub.s32 %s15, %s22
    %p176 = scmp.eq.s32.totalorder %s175, 0
    %s178 = sadd.s32 %s177, 1
    %s179 = scalar_select %p176, %s177, %s178
    %p182 = pneg %p176
    %p183 = scmp.eq.s32.totalorder %s15, 1
    %p184 = por %p182, %p183
    %p185 = scmp.ne.s32.totalorder %s177, %s180
    %p186 = scmp.eq.s32.totalorder %s15, 0
    %p187 = por %p185, %p186
    %p188 = scmp.ne.s32.totalorder %s177, %s180
    %p189 = scmp.eq.s32.totalorder %s20, 1
    %p190 = por %p188, %p189
    %p191 = scmp.ne.s32.totalorder %s180, %s181
    %p192 = scmp.eq.s32.totalorder %s20, 0
    %p193 = por %p191, %p192
    %p194 = scmp.ne.s32.totalorder %s180, %s181
    %p195 = scmp.eq.s32.totalorder %s21, 1
    %p196 = por %p194, %p195
    %p198 = scmp.ne.s32.totalorder %s181, %s197
    %p199 = scmp.eq.s32.totalorder %s21, 0
    %p200 = por %p198, %p199
    %p201 = scmp.le.s32.totalorder 1, %s15
    %p202 = scmp.lt.s32.totalorder %s15, 3
    %p203 = pnand %p201, %p202
    %p204 = pneg %p203
    // Predicated region
    $region9: #{tpu_custom_call.1} parent=5 // pred_check
      _
    $region10: #{tpu_custom_call.1} parent=5 // pred_check_branch
      %206 = sbr.rel (%p203) target = $region12
    $region11: #{tpu_custom_call.1} parent=5 // pred_region
      %s207 = ssub.s32 %s15, 1
      // Predicated region
      $region13: #{tpu_custom_call.1} parent=11 // pred_check
        %p208 = pneg %p62
      $region14: #{tpu_custom_call.1} parent=11 // pred_check_branch
        %210 = sbr.rel (%p208) target = $region16
      $region15: #{tpu_custom_call.1} parent=11 // pred_region
        _
      $region16: #{tpu_custom_call.1} parent=11 // pred_fallthru
        _
      // Predicated region
      $region17: #{tpu_custom_call.1} parent=11 // pred_check
        %p211 = pneg %p83
      $region18: #{tpu_custom_call.1} parent=11 // pred_check_branch
        %213 = sbr.rel (%p211) target = $region20
      $region19: #{tpu_custom_call.1} parent=11 // pred_region
        _
      $region20: #{tpu_custom_call.1} parent=11 // pred_fallthru
        _
      // Predicated region
      $region21: #{tpu_custom_call.1} parent=11 // pred_check
        %p214 = pneg %p104
      $region22: #{tpu_custom_call.1} parent=11 // pred_check_branch
        %216 = sbr.rel (%p214) target = $region24
      $region23: #{tpu_custom_call.1} parent=11 // pred_region
        _
      $region24: #{tpu_custom_call.1} parent=11 // pred_fallthru
        _
      // Predicated region
      $region25: #{tpu_custom_call.1} parent=11 // pred_check
        %p217 = pneg %p125
      $region26: #{tpu_custom_call.1} parent=11 // pred_check_branch
        %219 = sbr.rel (%p217) target = $region28
      $region27: #{tpu_custom_call.1} parent=11 // pred_region
        _
      $region28: #{tpu_custom_call.1} parent=11 // pred_fallthru
        _
      // Predicated region
      $region29: #{tpu_custom_call.1} parent=11 // pred_check
        %p220 = pneg %p146
      $region30: #{tpu_custom_call.1} parent=11 // pred_check_branch
        %222 = sbr.rel (%p220) target = $region32
      $region31: #{tpu_custom_call.1} parent=11 // pred_region
        _
      $region32: #{tpu_custom_call.1} parent=11 // pred_fallthru
        _
      // Predicated region
      $region33: #{tpu_custom_call.1} parent=11 // pred_check
        %p223 = pneg %p167
      $region34: #{tpu_custom_call.1} parent=11 // pred_check_branch
        %225 = sbr.rel (%p223) target = $region36
      $region35: #{tpu_custom_call.1} parent=11 // pred_region
        _
      $region36: #{tpu_custom_call.1} parent=11 // pred_fallthru
        _
    $region12: #{tpu_custom_call.1} parent=5 // pred_fallthru
      _
    %p226 = scmp.lt.s32.totalorder %s15, 2
    // Predicated region
    $region37: #{tpu_custom_call.1} parent=5 // pred_check
      %p227 = pneg %p226
    $region38: #{tpu_custom_call.1} parent=5 // pred_check_branch
      %229 = sbr.rel (%p227) target = $region40
    $region39: #{tpu_custom_call.1} parent=5 // pred_region
      // Predicated region
      $region41: #{tpu_custom_call.1} parent=39 // pred_check
        %p230 = pneg %p35
      $region42: #{tpu_custom_call.1} parent=39 // pred_check_branch
        %232 = sbr.rel (%p230) target = $region44
      $region43: #{tpu_custom_call.1} parent=39 // pred_region
        %s233 = smul.u32 32, %s15
        %p234 = scmp.lt.s32.totalorder %s233, 63
        %s235 = scalar_select %p234, %s233, 63
        %s236 = smul.addr %s235, 8
        %s237 = scalar_lea.vmem %s0, %s236
        %s238 = smul.u32 32, %s15
      $region44: #{tpu_custom_call.1} parent=39 // pred_fallthru
        _
    $region40: #{tpu_custom_call.1} parent=5 // pred_fallthru
      _
    %p239 = scmp.le.s32.totalorder 1, %s15
    %p240 = scmp.lt.s32.totalorder %s15, 3
    %p241 = pnand %p239, %p240
    %p242 = pneg %p241
    // Predicated region
    $region45: #{tpu_custom_call.1} parent=5 // pred_check
      _
    $region46: #{tpu_custom_call.1} parent=5 // pred_check_branch
      %244 = sbr.rel (%p241) target = $region48
    $region47: #{tpu_custom_call.1} parent=5 // pred_region
      %s245 = ssub.s32 %s15, 1
      %s246 = smul.u32 32, %s20
      %p247 = scmp.lt.s32.totalorder %s246, 63
      %s248 = scalar_select %p247, %s246, 63
      %s249 = smul.addr %s248, 8
      %s250 = scalar_lea.vmem %s0, %s249
      %p251 = pneg %p41
      %p252 = pneg %p38
      %p253 = pneg %p62
      %p254 = pneg %p59
      %p255 = pneg %p83
      %p256 = pneg %p80
      %p257 = pneg %p104
      %p258 = pneg %p101
      %p259 = pneg %p125
      %p260 = pneg %p122
      %p261 = pneg %p146
      %p262 = pneg %p143
      %p263 = pneg %p167
      %p264 = pneg %p164
      %p265 = pneg %p193
      %p266 = pneg %p190
      %s267 = smul.u32 32, %s20
      %p268 = scmp.lt.s32.totalorder %s267, 63
      %s269 = scalar_select %p268, %s267, 63
      %s270 = smul.addr %s269, 8
      %s271 = scalar_lea.vmem %s7, %s270
      %s272 = smul.u32 32, %s20
      %p273 = scmp.lt.s32.totalorder %s272, 63
      %s274 = scalar_select %p273, %s272, 63
      %s275 = smul.addr %s274, 8
      %s276 = scalar_lea.vmem %s0, %s275
      %s277 = smul.u32 32, %s20
      %s278 = smul.u32 32, %s20
      %p279 = scmp.lt.s32.totalorder %s278, 63
      %s280 = scalar_select %p279, %s278, 63
      %s281 = smul.addr %s280, 8
      %s282 = scalar_lea.vmem %s7, %s281
      %s283 = smul.u32 32, %s20
      %v285 = vld [vmem:[%s276] sm:$0xff]
      %v286 = vld [vmem:[%s276 + $0x8] sm:$0xff]
      %v287 = vld [vmem:[%s276 + $0x10] sm:$0xff]
      %v288 = vld [vmem:[%s276 + $0x18] sm:$0xff]
      %v289 = vld [vmem:[%s276 + $0x20] sm:$0xff]
      %v290 = vld [vmem:[%s276 + $0x28] sm:$0xff]
      %v291 = vld [vmem:[%s276 + $0x30] sm:$0xff]
      %v292 = vld [vmem:[%s276 + $0x38] sm:$0xff]
      %v293 = vld [vmem:[%s276 + $0x40] sm:$0xff]
      %v294 = vld [vmem:[%s276 + $0x48] sm:$0xff]
      %v295 = vld [vmem:[%s276 + $0x50] sm:$0xff]
      %v296 = vld [vmem:[%s276 + $0x58] sm:$0xff]
      %v297 = vld [vmem:[%s276 + $0x60] sm:$0xff]
      %v298 = vld [vmem:[%s276 + $0x68] sm:$0xff]
      %v299 = vld [vmem:[%s276 + $0x70] sm:$0xff]
      %v300 = vld [vmem:[%s276 + $0x78] sm:$0xff]
      %v301 = vld [vmem:[%s276 + $0x80] sm:$0xff]
      %v302 = vld [vmem:[%s276 + $0x88] sm:$0xff]
      %v303 = vld [vmem:[%s276 + $0x90] sm:$0xff]
      %v304 = vld [vmem:[%s276 + $0x98] sm:$0xff]
      %v305 = vld [vmem:[%s276 + $0xa0] sm:$0xff]
      %v306 = vld [vmem:[%s276 + $0xa8] sm:$0xff]
      %v307 = vld [vmem:[%s276 + $0xb0] sm:$0xff]
      %v308 = vld [vmem:[%s276 + $0xb8] sm:$0xff]
      %v309 = vld [vmem:[%s276 + $0xc0] sm:$0xff]
      %v310 = vld [vmem:[%s276 + $0xc8] sm:$0xff]
      %v311 = vld [vmem:[%s276 + $0xd0] sm:$0xff]
      %v312 = vld [vmem:[%s276 + $0xd8] sm:$0xff]
      %v313 = vld [vmem:[%s276 + $0xe0] sm:$0xff]
      %v314 = vld [vmem:[%s276 + $0xe8] sm:$0xff]
      %v315 = vld [vmem:[%s276 + $0xf0] sm:$0xff]
      %v316 = vld [vmem:[%s276 + $0xf8] sm:$0xff]
      %v317 = vpack.c.bf16 %v286, %v285
      %v318 = vpack.c.bf16 %v288, %v287
      %v319 = vpack.c.bf16 %v290, %v289
      %v320 = vpack.c.bf16 %v292, %v291
      %v321 = vpack.c.bf16 %v294, %v293
      %v322 = vpack.c.bf16 %v296, %v295
      %v323 = vpack.c.bf16 %v298, %v297
      %v324 = vpack.c.bf16 %v300, %v299
      %v325 = vpack.c.bf16 %v302, %v301
      %v326 = vpack.c.bf16 %v304, %v303
      %v327 = vpack.c.bf16 %v306, %v305
      %v328 = vpack.c.bf16 %v308, %v307
      %v329 = vpack.c.bf16 %v310, %v309
      %v330 = vpack.c.bf16 %v312, %v311
      %v331 = vpack.c.bf16 %v314, %v313
      %v332 = vpack.c.bf16 %v316, %v315
      %v333 = vld [vmem:[%s1] sm:$0xf]
      %v334 = vld [vmem:[%s1 + $0x4] sm:$0xf]
      %v335 = vld [vmem:[%s2] sm:$0x1]
      %v337 = vlaneseq
      %v338 = vshrl.u32 %v337, 7
      %v339 = vsub.s32 0, %v338
      %v340 = vrot.slane %v335, %v339
      %v344 = vunpack.c.l.b16 %v333
      %v345 = vunpack.c.l.b16 %v334
      %v346 = vpack.c.b16 %v345, %v344
      %vm348 = vcmask 130048
      %v350 = vsel %vm348, %v317, 0
      %v353 = vsel %vm348, %v318, 0
      %v356 = vsel %vm348, %v319, 0
      %v359 = vsel %vm348, %v320, 0
      %v362 = vsel %vm348, %v321, 0
      %v365 = vsel %vm348, %v322, 0
      %v368 = vsel %vm348, %v323, 0
      %v371 = vsel %vm348, %v324, 0
      %v374 = vsel %vm348, %v325, 0
      %v377 = vsel %vm348, %v326, 0
      %v380 = vsel %vm348, %v327, 0
      %v383 = vsel %vm348, %v328, 0
      %v386 = vsel %vm348, %v329, 0
      %v389 = vsel %vm348, %v330, 0
      %v392 = vsel %vm348, %v331, 0
      %v395 = vsel %vm348, %v332, 0
      %397 = vmatprep.subr.bf16.mxu0 0
      %398 = vmatpush1.bf16.msra.mxu0 %v346
      %399 = vmatprep.subr.bf16.mxu0 0
      %400 = vmatpush1.bf16.msra.mxu0 0
      %401 = vmatprep.subr.bf16.mxu0 0
      %402 = vmatpush1.bf16.msra.mxu0 0
      %403 = vmatprep.subr.bf16.mxu0 0
      %404 = vmatpush1.bf16.msra.mxu0 0
      %405 = vmatprep.subr.bf16.mxu0 0
      %406 = vmatpush1.bf16.msra.mxu0 0
      %407 = vmatprep.subr.bf16.mxu0 0
      %408 = vmatpush1.bf16.msra.mxu0 0
      %409 = vmatprep.subr.bf16.mxu0 0
      %410 = vmatpush1.bf16.msra.mxu0 0
      %411 = vmatprep.subr.bf16.mxu0 0
      %412 = vmatpush1.bf16.msra.mxu0 0
      %413 = vmatprep.subr.bf16.mxu0 0
      %414 = vmatpush1.bf16.msra.mxu0 0
      %415 = vmatprep.subr.bf16.mxu0 0
      %416 = vmatpush1.bf16.msra.mxu0 0
      %417 = vmatprep.subr.bf16.mxu0 0
      %418 = vmatpush1.bf16.msra.mxu0 0
      %419 = vmatprep.subr.bf16.mxu0 0
      %420 = vmatpush1.bf16.msra.mxu0 0
      %421 = vmatprep.subr.bf16.mxu0 0
      %422 = vmatpush1.bf16.msra.mxu0 0
      %423 = vmatprep.subr.bf16.mxu0 0
      %424 = vmatpush1.bf16.msra.mxu0 0
      %425 = vmatprep.subr.bf16.mxu0 0
      %426 = vmatpush1.bf16.msra.mxu0 0
      %427 = vmatprep.subr.bf16.mxu0 0
      %428 = vmatpush1.bf16.msra.mxu0 0
      %429 = vmatprep.mubr.bf16.mxu0 0
      %430 = vmatmul.mubr.bf16.gmra.mrb[0].mxu0 %v350
      %v431 = vpop.f32.mrb[0].mxu0
      %v432 = vadd.f32 %v340, %v431
      %v433 = vpop.f32.mrb[0].mxu0
      %v434 = vpop.f32.mrb[0].mxu0
      %v435 = vadd.f32 %v340, %v434
      %v436 = vpop.f32.mrb[0].mxu0
      %437 = vmatprep.mubr.bf16.mxu0 0
      %438 = vmatmul.mubr.bf16.gmra.mrb[0].mxu0 %v353
      %v439 = vpop.f32.mrb[0].mxu0
      %v440 = vadd.f32 %v340, %v439
      %v441 = vpop.f32.mrb[0].mxu0
      %v442 = vpop.f32.mrb[0].mxu0
      %v443 = vadd.f32 %v340, %v442
      %v444 = vpop.f32.mrb[0].mxu0
      %445 = vmatprep.mubr.bf16.mxu0 0
      %446 = vmatmul.mubr.bf16.gmra.mrb[0].mxu0 %v356
      %v447 = vpop.f32.mrb[0].mxu0
      %v448 = vadd.f32 %v340, %v447
      %v449 = vpop.f32.mrb[0].mxu0
      %v450 = vpop.f32.mrb[0].mxu0
      %v451 = vadd.f32 %v340, %v450
      %v452 = vpop.f32.mrb[0].mxu0
      %453 = vmatprep.mubr.bf16.mxu0 0
      %454 = vmatmul.mubr.bf16.gmra.mrb[0].mxu0 %v359
      %v455 = vpop.f32.mrb[0].mxu0
      %v456 = vadd.f32 %v340, %v455
      %v457 = vpop.f32.mrb[0].mxu0
      %v458 = vpop.f32.mrb[0].mxu0
      %v459 = vadd.f32 %v340, %v458
      %v460 = vpop.f32.mrb[0].mxu0
      %461 = vmatprep.mubr.bf16.mxu0 0
      %462 = vmatmul.mubr.bf16.gmra.mrb[0].mxu0 %v362
      %v463 = vpop.f32.mrb[0].mxu0
      %v464 = vadd.f32 %v340, %v463
      %v465 = vpop.f32.mrb[0].mxu0
      %v466 = vpop.f32.mrb[0].mxu0
      %v467 = vadd.f32 %v340, %v466
      %v468 = vpop.f32.mrb[0].mxu0
      %469 = vmatprep.mubr.bf16.mxu0 0
      %470 = vmatmul.mubr.bf16.gmra.mrb[0].mxu0 %v365
      %v471 = vpop.f32.mrb[0].mxu0
      %v472 = vadd.f32 %v340, %v471
      %v473 = vpop.f32.mrb[0].mxu0
      %v474 = vpop.f32.mrb[0].mxu0
      %v475 = vadd.f32 %v340, %v474
      %v476 = vpop.f32.mrb[0].mxu0
      %477 = vmatprep.mubr.bf16.mxu0 0
      %478 = vmatmul.mubr.bf16.gmra.mrb[0].mxu0 %v368
      %v479 = vpop.f32.mrb[0].mxu0
      %v480 = vadd.f32 %v340, %v479
      %v481 = vpop.f32.mrb[0].mxu0
      %v482 = vpop.f32.mrb[0].mxu0
      %v483 = vadd.f32 %v340, %v482
      %v484 = vpop.f32.mrb[0].mxu0
      %485 = vmatprep.mubr.bf16.mxu0 0
      %486 = vmatmul.mubr.bf16.gmra.mrb[0].mxu0 %v371
      %v487 = vpop.f32.mrb[0].mxu0
      %v488 = vadd.f32 %v340, %v487
      %v489 = vpop.f32.mrb[0].mxu0
      %v490 = vpop.f32.mrb[0].mxu0
      %v491 = vadd.f32 %v340, %v490
      %v492 = vpop.f32.mrb[0].mxu0
      %493 = vmatprep.mubr.bf16.mxu0 0
      %494 = vmatmul.mubr.bf16.gmra.mrb[0].mxu0 %v374
      %v495 = vpop.f32.mrb[0].mxu0
      %v496 = vadd.f32 %v340, %v495
      %v497 = vpop.f32.mrb[0].mxu0
      %v498 = vpop.f32.mrb[0].mxu0
      %v499 = vadd.f32 %v340, %v498
      %v500 = vpop.f32.mrb[0].mxu0
      %501 = vmatprep.mubr.bf16.mxu0 0
      %502 = vmatmul.mubr.bf16.gmra.mrb[0].mxu0 %v377
      %v503 = vpop.f32.mrb[0].mxu0
      %v504 = vadd.f32 %v340, %v503
      %v505 = vpop.f32.mrb[0].mxu0
      %v506 = vpop.f32.mrb[0].mxu0
      %v507 = vadd.f32 %v340, %v506
      %v508 = vpop.f32.mrb[0].mxu0
      %509 = vmatprep.mubr.bf16.mxu0 0
      %510 = vmatmul.mubr.bf16.gmra.mrb[0].mxu0 %v380
      %v511 = vpop.f32.mrb[0].mxu0
      %v512 = vadd.f32 %v340, %v511
      %v513 = vpop.f32.mrb[0].mxu0
      %v514 = vpop.f32.mrb[0].mxu0
      %v515 = vadd.f32 %v340, %v514
      %v516 = vpop.f32.mrb[0].mxu0
      %517 = vmatprep.mubr.bf16.mxu0 0
      %518 = vmatmul.mubr.bf16.gmra.mrb[0].mxu0 %v383
      %v519 = vpop.f32.mrb[0].mxu0
      %v520 = vadd.f32 %v340, %v519
      %v521 = vpop.f32.mrb[0].mxu0
      %v522 = vpop.f32.mrb[0].mxu0
      %v523 = vadd.f32 %v340, %v522
      %v524 = vpop.f32.mrb[0].mxu0
      %525 = vmatprep.mubr.bf16.mxu0 0
      %526 = vmatmul.mubr.bf16.gmra.mrb[0].mxu0 %v386
      %v527 = vpop.f32.mrb[0].mxu0
      %v528 = vadd.f32 %v340, %v527
      %v529 = vpop.f32.mrb[0].mxu0
      %v530 = vpop.f32.mrb[0].mxu0
      %v531 = vadd.f32 %v340, %v530
      %v532 = vpop.f32.mrb[0].mxu0
      %533 = vmatprep.mubr.bf16.mxu0 0
      %534 = vmatmul.mubr.bf16.gmra.mrb[0].mxu0 %v389
      %v535 = vpop.f32.mrb[0].mxu0
      %v536 = vadd.f32 %v340, %v535
      %v537 = vpop.f32.mrb[0].mxu0
      %v538 = vpop.f32.mrb[0].mxu0
      %v539 = vadd.f32 %v340, %v538
      %v540 = vpop.f32.mrb[0].mxu0
      %541 = vmatprep.mubr.bf16.mxu0 0
      %542 = vmatmul.mubr.bf16.gmra.mrb[0].mxu0 %v392
      %v543 = vpop.f32.mrb[0].mxu0
      %v544 = vadd.f32 %v340, %v543
      %v545 = vpop.f32.mrb[0].mxu0
      %v546 = vpop.f32.mrb[0].mxu0
      %v547 = vadd.f32 %v340, %v546
      %v548 = vpop.f32.mrb[0].mxu0
      %549 = vmatprep.mubr.bf16.mxu0 0
      %550 = vmatmul.mubr.bf16.gmra.mrb[0].mxu0 %v395
      %v551 = vpop.f32.mrb[0].mxu0
      %v552 = vadd.f32 %v340, %v551
      %v553 = vpop.f32.mrb[0].mxu0
      %v554 = vpop.f32.mrb[0].mxu0
      %v555 = vadd.f32 %v340, %v554
      %v556 = vpop.f32.mrb[0].mxu0
      %557 = vdwg.mxu0
      %v558 = vmax.f32 %v432, 0.0
      %v559 = vmax.f32 %v435, 0.0
      %v560 = vmax.f32 %v440, 0.0
      %v561 = vmax.f32 %v443, 0.0
      %v562 = vmax.f32 %v448, 0.0
      %v563 = vmax.f32 %v451, 0.0
      %v564 = vmax.f32 %v456, 0.0
      %v565 = vmax.f32 %v459, 0.0
      %v566 = vmax.f32 %v464, 0.0
      %v567 = vmax.f32 %v467, 0.0
      %v568 = vmax.f32 %v472, 0.0
      %v569 = vmax.f32 %v475, 0.0
      %v570 = vmax.f32 %v480, 0.0
      %v571 = vmax.f32 %v483, 0.0
      %v572 = vmax.f32 %v488, 0.0
      %v573 = vmax.f32 %v491, 0.0
      %v574 = vmax.f32 %v496, 0.0
      %v575 = vmax.f32 %v499, 0.0
      %v576 = vmax.f32 %v504, 0.0
      %v577 = vmax.f32 %v507, 0.0
      %v578 = vmax.f32 %v512, 0.0
      %v579 = vmax.f32 %v515, 0.0
      %v580 = vmax.f32 %v520, 0.0
      %v581 = vmax.f32 %v523, 0.0
      %v582 = vmax.f32 %v528, 0.0
      %v583 = vmax.f32 %v531, 0.0
      %v584 = vmax.f32 %v536, 0.0
      %v585 = vmax.f32 %v539, 0.0
      %v586 = vmax.f32 %v544, 0.0
      %v587 = vmax.f32 %v547, 0.0
      %v588 = vmax.f32 %v552, 0.0
      %v589 = vmax.f32 %v555, 0.0
      %v590 = vpack.c.bf16 %v559, %v558
      %v591 = vpack.c.bf16 %v561, %v560
      %v592 = vpack.c.bf16 %v563, %v562
      %v593 = vpack.c.bf16 %v565, %v564
      %v594 = vpack.c.bf16 %v567, %v566
      %v595 = vpack.c.bf16 %v569, %v568
      %v596 = vpack.c.bf16 %v571, %v570
      %v597 = vpack.c.bf16 %v573, %v572
      %v598 = vpack.c.bf16 %v575, %v574
      %v599 = vpack.c.bf16 %v577, %v576
      %v600 = vpack.c.bf16 %v579, %v578
      %v601 = vpack.c.bf16 %v581, %v580
      %v602 = vpack.c.bf16 %v583, %v582
      %v603 = vpack.c.bf16 %v585, %v584
      %v604 = vpack.c.bf16 %v587, %v586
      %v605 = vpack.c.bf16 %v589, %v588
      %v606 = vld [vmem:[%s3] sm:$0xf]
      %v607 = vld [vmem:[%s3 + $0x4] sm:$0xf]
      %v608 = vld [vmem:[%s3 + $0x8] sm:$0xf]
      %v609 = vld [vmem:[%s3 + $0xc] sm:$0xf]
      %v610 = vld [vmem:[%s4] sm:$0x1]
      %v612 = vlaneseq
      %v613 = vshrl.u32 %v612, 7
      %v614 = vsub.s32 0, %v613
      %v615 = vrot.slane %v610, %v614
      %v621 = vunpack.c.l.b16 %v606
      %v622 = vunpack.c.l.b16 %v607
      %v623 = vunpack.c.l.b16 %v608
      %v624 = vunpack.c.l.b16 %v609
      %v625 = vpack.c.b16 %v622, %v621
      %v626 = vpack.c.b16 %v624, %v623
      %vm629 = vcmask 261120
      %v631 = vsel %vm629, %v590, 0
      %v634 = vsel %vm629, %v591, 0
      %v637 = vsel %vm629, %v592, 0
      %v640 = vsel %vm629, %v593, 0
      %v643 = vsel %vm629, %v594, 0
      %v646 = vsel %vm629, %v595, 0
      %v649 = vsel %vm629, %v596, 0
      %v652 = vsel %vm629, %v597, 0
      %v655 = vsel %vm629, %v598, 0
      %v658 = vsel %vm629, %v599, 0
      %v661 = vsel %vm629, %v600, 0
      %v664 = vsel %vm629, %v601, 0
      %v667 = vsel %vm629, %v602, 0
      %v670 = vsel %vm629, %v603, 0
      %v673 = vsel %vm629, %v604, 0
      %v676 = vsel %vm629, %v605, 0
      %678 = vmatprep.subr.bf16.mxu0 0
      %679 = vmatpush1.bf16.msra.mxu0 %v625
      %680 = vmatprep.subr.bf16.mxu0 0
      %681 = vmatpush1.bf16.msra.mxu0 %v626
      %682 = vmatprep.subr.bf16.mxu0 0
      %683 = vmatpush1.bf16.msra.mxu0 0
      %684 = vmatprep.subr.bf16.mxu0 0
      %685 = vmatpush1.bf16.msra.mxu0 0
      %686 = vmatprep.subr.bf16.mxu0 0
      %687 = vmatpush1.bf16.msra.mxu0 0
      %688 = vmatprep.subr.bf16.mxu0 0
      %689 = vmatpush1.bf16.msra.mxu0 0
      %690 = vmatprep.subr.bf16.mxu0 0
      %691 = vmatpush1.bf16.msra.mxu0 0
      %692 = vmatprep.subr.bf16.mxu0 0
      %693 = vmatpush1.bf16.msra.mxu0 0
      %694 = vmatprep.subr.bf16.mxu0 0
      %695 = vmatpush1.bf16.msra.mxu0 0
      %696 = vmatprep.subr.bf16.mxu0 0
      %697 = vmatpush1.bf16.msra.mxu0 0
      %698 = vmatprep.subr.bf16.mxu0 0
      %699 = vmatpush1.bf16.msra.mxu0 0
      %700 = vmatprep.subr.bf16.mxu0 0
      %701 = vmatpush1.bf16.msra.mxu0 0
      %702 = vmatprep.subr.bf16.mxu0 0
      %703 = vmatpush1.bf16.msra.mxu0 0
      %704 = vmatprep.subr.bf16.mxu0 0
      %705 = vmatpush1.bf16.msra.mxu0 0
      %706 = vmatprep.subr.bf16.mxu0 0
      %707 = vmatpush1.bf16.msra.mxu0 0
      %708 = vmatprep.subr.bf16.mxu0 0
      %709 = vmatpush1.bf16.msra.mxu0 0
      %710 = vmatprep.mubr.bf16.mxu0 0
      %711 = vmatmul.mubr.bf16.gmra.mrb[0].mxu0 %v631
      %v712 = vpop.f32.mrb[0].mxu0
      %v713 = vadd.f32 %v615, %v712
      %v714 = vpop.f32.mrb[0].mxu0
      %v715 = vpop.f32.mrb[0].mxu0
      %v716 = vadd.f32 %v615, %v715
      %v717 = vpop.f32.mrb[0].mxu0
      %718 = vmatprep.mubr.bf16.mxu0 0
      %719 = vmatmul.mubr.bf16.gmra.mrb[0].mxu0 %v634
      %v720 = vpop.f32.mrb[0].mxu0
      %v721 = vadd.f32 %v615, %v720
      %v722 = vpop.f32.mrb[0].mxu0
      %v723 = vpop.f32.mrb[0].mxu0
      %v724 = vadd.f32 %v615, %v723
      %v725 = vpop.f32.mrb[0].mxu0
      %726 = vmatprep.mubr.bf16.mxu0 0
      %727 = vmatmul.mubr.bf16.gmra.mrb[0].mxu0 %v637
      %v728 = vpop.f32.mrb[0].mxu0
      %v729 = vadd.f32 %v615, %v728
      %v730 = vpop.f32.mrb[0].mxu0
      %v731 = vpop.f32.mrb[0].mxu0
      %v732 = vadd.f32 %v615, %v731
      %v733 = vpop.f32.mrb[0].mxu0
      %734 = vmatprep.mubr.bf16.mxu0 0
      %735 = vmatmul.mubr.bf16.gmra.mrb[0].mxu0 %v640
      %v736 = vpop.f32.mrb[0].mxu0
      %v737 = vadd.f32 %v615, %v736
      %v738 = vpop.f32.mrb[0].mxu0
      %v739 = vpop.f32.mrb[0].mxu0
      %v740 = vadd.f32 %v615, %v739
      %v741 = vpop.f32.mrb[0].mxu0
      %742 = vmatprep.mubr.bf16.mxu0 0
      %743 = vmatmul.mubr.bf16.gmra.mrb[0].mxu0 %v643
      %v744 = vpop.f32.mrb[0].mxu0
      %v745 = vadd.f32 %v615, %v744
      %v746 = vpop.f32.mrb[0].mxu0
      %v747 = vpop.f32.mrb[0].mxu0
      %v748 = vadd.f32 %v615, %v747
      %v749 = vpop.f32.mrb[0].mxu0
      %750 = vmatprep.mubr.bf16.mxu0 0
      %751 = vmatmul.mubr.bf16.gmra.mrb[0].mxu0 %v646
      %v752 = vpop.f32.mrb[0].mxu0
      %v753 = vadd.f32 %v615, %v752
      %v754 = vpop.f32.mrb[0].mxu0
      %v755 = vpop.f32.mrb[0].mxu0
      %v756 = vadd.f32 %v615, %v755
      %v757 = vpop.f32.mrb[0].mxu0
      %758 = vmatprep.mubr.bf16.mxu0 0
      %759 = vmatmul.mubr.bf16.gmra.mrb[0].mxu0 %v649
      %v760 = vpop.f32.mrb[0].mxu0
      %v761 = vadd.f32 %v615, %v760
      %v762 = vpop.f32.mrb[0].mxu0
      %v763 = vpop.f32.mrb[0].mxu0
      %v764 = vadd.f32 %v615, %v763
      %v765 = vpop.f32.mrb[0].mxu0
      %766 = vmatprep.mubr.bf16.mxu0 0
      %767 = vmatmul.mubr.bf16.gmra.mrb[0].mxu0 %v652
      %v768 = vpop.f32.mrb[0].mxu0
      %v769 = vadd.f32 %v615, %v768
      %v770 = vpop.f32.mrb[0].mxu0
      %v771 = vpop.f32.mrb[0].mxu0
      %v772 = vadd.f32 %v615, %v771
      %v773 = vpop.f32.mrb[0].mxu0
      %774 = vmatprep.mubr.bf16.mxu0 0
      %775 = vmatmul.mubr.bf16.gmra.mrb[0].mxu0 %v655
      %v776 = vpop.f32.mrb[0].mxu0
      %v777 = vadd.f32 %v615, %v776
      %v778 = vpop.f32.mrb[0].mxu0
      %v779 = vpop.f32.mrb[0].mxu0
      %v780 = vadd.f32 %v615, %v779
      %v781 = vpop.f32.mrb[0].mxu0
      %782 = vmatprep.mubr.bf16.mxu0 0
      %783 = vmatmul.mubr.bf16.gmra.mrb[0].mxu0 %v658
      %v784 = vpop.f32.mrb[0].mxu0
      %v785 = vadd.f32 %v615, %v784
      %v786 = vpop.f32.mrb[0].mxu0
      %v787 = vpop.f32.mrb[0].mxu0
      %v788 = vadd.f32 %v615, %v787
      %v789 = vpop.f32.mrb[0].mxu0
      %790 = vmatprep.mubr.bf16.mxu0 0
      %791 = vmatmul.mubr.bf16.gmra.mrb[0].mxu0 %v661
      %v792 = vpop.f32.mrb[0].mxu0
      %v793 = vadd.f32 %v615, %v792
      %v794 = vpop.f32.mrb[0].mxu0
      %v795 = vpop.f32.mrb[0].mxu0
      %v796 = vadd.f32 %v615, %v795
      %v797 = vpop.f32.mrb[0].mxu0
      %798 = vmatprep.mubr.bf16.mxu0 0
      %799 = vmatmul.mubr.bf16.gmra.mrb[0].mxu0 %v664
      %v800 = vpop.f32.mrb[0].mxu0
      %v801 = vadd.f32 %v615, %v800
      %v802 = vpop.f32.mrb[0].mxu0
      %v803 = vpop.f32.mrb[0].mxu0
      %v804 = vadd.f32 %v615, %v803
      %v805 = vpop.f32.mrb[0].mxu0
      %806 = vmatprep.mubr.bf16.mxu0 0
      %807 = vmatmul.mubr.bf16.gmra.mrb[0].mxu0 %v667
      %v808 = vpop.f32.mrb[0].mxu0
      %v809 = vadd.f32 %v615, %v808
      %v810 = vpop.f32.mrb[0].mxu0
      %v811 = vpop.f32.mrb[0].mxu0
      %v812 = vadd.f32 %v615, %v811
      %v813 = vpop.f32.mrb[0].mxu0
      %814 = vmatprep.mubr.bf16.mxu0 0
      %815 = vmatmul.mubr.bf16.gmra.mrb[0].mxu0 %v670
      %v816 = vpop.f32.mrb[0].mxu0
      %v817 = vadd.f32 %v615, %v816
      %v818 = vpop.f32.mrb[0].mxu0
      %v819 = vpop.f32.mrb[0].mxu0
      %v820 = vadd.f32 %v615, %v819
      %v821 = vpop.f32.mrb[0].mxu0
      %822 = vmatprep.mubr.bf16.mxu0 0
      %823 = vmatmul.mubr.bf16.gmra.mrb[0].mxu0 %v673
      %v824 = vpop.f32.mrb[0].mxu0
      %v825 = vadd.f32 %v615, %v824
      %v826 = vpop.f32.mrb[0].mxu0
      %v827 = vpop.f32.mrb[0].mxu0
      %v828 = vadd.f32 %v615, %v827
      %v829 = vpop.f32.mrb[0].mxu0
      %830 = vmatprep.mubr.bf16.mxu0 0
      %831 = vmatmul.mubr.bf16.gmra.mrb[0].mxu0 %v676
      %v832 = vpop.f32.mrb[0].mxu0
      %v833 = vadd.f32 %v615, %v832
      %v834 = vpop.f32.mrb[0].mxu0
      %v835 = vpop.f32.mrb[0].mxu0
      %v836 = vadd.f32 %v615, %v835
      %v837 = vpop.f32.mrb[0].mxu0
      %838 = vdwg.mxu0
      %v839 = vmax.f32 %v713, 0.0
      %v840 = vmax.f32 %v716, 0.0
      %v841 = vmax.f32 %v721, 0.0
      %v842 = vmax.f32 %v724, 0.0
      %v843 = vmax.f32 %v729, 0.0
      %v844 = vmax.f32 %v732, 0.0
      %v845 = vmax.f32 %v737, 0.0
      %v846 = vmax.f32 %v740, 0.0
      %v847 = vmax.f32 %v745, 0.0
      %v848 = vmax.f32 %v748, 0.0
      %v849 = vmax.f32 %v753, 0.0
      %v850 = vmax.f32 %v756, 0.0
      %v851 = vmax.f32 %v761, 0.0
      %v852 = vmax.f32 %v764, 0.0
      %v853 = vmax.f32 %v769, 0.0
      %v854 = vmax.f32 %v772, 0.0
      %v855 = vmax.f32 %v777, 0.0
      %v856 = vmax.f32 %v780, 0.0
      %v857 = vmax.f32 %v785, 0.0
      %v858 = vmax.f32 %v788, 0.0
      %v859 = vmax.f32 %v793, 0.0
      %v860 = vmax.f32 %v796, 0.0
      %v861 = vmax.f32 %v801, 0.0
      %v862 = vmax.f32 %v804, 0.0
      %v863 = vmax.f32 %v809, 0.0
      %v864 = vmax.f32 %v812, 0.0
      %v865 = vmax.f32 %v817, 0.0
      %v866 = vmax.f32 %v820, 0.0
      %v867 = vmax.f32 %v825, 0.0
      %v868 = vmax.f32 %v828, 0.0
      %v869 = vmax.f32 %v833, 0.0
      %v870 = vmax.f32 %v836, 0.0
      %v871 = vld [vmem:[%s5] sm:$0x1]
      %v873 = vlaneseq
      %v874 = vshrl.u32 %v873, 7
      %v875 = vsub.s32 0, %v874
      %v876 = vrot.slane %v871, %v875
      %v878 = vmul.f32 %v839, %v876
      %v879 = vmul.f32 %v840, %v876
      %v880 = vmul.f32 %v841, %v876
      %v881 = vmul.f32 %v842, %v876
      %v882 = vmul.f32 %v843, %v876
      %v883 = vmul.f32 %v844, %v876
      %v884 = vmul.f32 %v845, %v876
      %v885 = vmul.f32 %v846, %v876
      %v886 = vmul.f32 %v847, %v876
      %v887 = vmul.f32 %v848, %v876
      %v888 = vmul.f32 %v849, %v876
      %v889 = vmul.f32 %v850, %v876
      %v890 = vmul.f32 %v851, %v876
      %v891 = vmul.f32 %v852, %v876
      %v892 = vmul.f32 %v853, %v876
      %v893 = vmul.f32 %v854, %v876
      %v894 = vmul.f32 %v855, %v876
      %v895 = vmul.f32 %v856, %v876
      %v896 = vmul.f32 %v857, %v876
      %v897 = vmul.f32 %v858, %v876
      %v898 = vmul.f32 %v859, %v876
      %v899 = vmul.f32 %v860, %v876
      %v900 = vmul.f32 %v861, %v876
      %v901 = vmul.f32 %v862, %v876
      %v902 = vmul.f32 %v863, %v876
      %v903 = vmul.f32 %v864, %v876
      %v904 = vmul.f32 %v865, %v876
      %v905 = vmul.f32 %v866, %v876
      %v906 = vmul.f32 %v867, %v876
      %v907 = vmul.f32 %v868, %v876
      %v908 = vmul.f32 %v869, %v876
      %v909 = vmul.f32 %v870, %v876
      %v910 = vsel %vm629, %v878, 0.0
      %911 = vadd.xlane.f32.xlu0 %v910
      %v912 = vpop.xlane.xlu0 %911
      %v913 = vsel %vm629, %v879, 0.0
      %914 = vadd.xlane.f32.xlu0 %v913
      %v915 = vpop.xlane.xlu0 %914
      %v916 = vsel %vm629, %v880, 0.0
      %917 = vadd.xlane.f32.xlu0 %v916
      %v918 = vpop.xlane.xlu0 %917
      %v919 = vsel %vm629, %v881, 0.0
      %920 = vadd.xlane.f32.xlu0 %v919
      %v921 = vpop.xlane.xlu0 %920
      %v922 = vsel %vm629, %v882, 0.0
      %923 = vadd.xlane.f32.xlu0 %v922
      %v924 = vpop.xlane.xlu0 %923
      %v925 = vsel %vm629, %v883, 0.0
      %926 = vadd.xlane.f32.xlu0 %v925
      %v927 = vpop.xlane.xlu0 %926
      %v928 = vsel %vm629, %v884, 0.0
      %929 = vadd.xlane.f32.xlu0 %v928
      %v930 = vpop.xlane.xlu0 %929
      %v931 = vsel %vm629, %v885, 0.0
      %932 = vadd.xlane.f32.xlu0 %v931
      %v933 = vpop.xlane.xlu0 %932
      %v934 = vsel %vm629, %v886, 0.0
      %935 = vadd.xlane.f32.xlu0 %v934
      %v936 = vpop.xlane.xlu0 %935
      %v937 = vsel %vm629, %v887, 0.0
      %938 = vadd.xlane.f32.xlu0 %v937
      %v939 = vpop.xlane.xlu0 %938
      %v940 = vsel %vm629, %v888, 0.0
      %941 = vadd.xlane.f32.xlu0 %v940
      %v942 = vpop.xlane.xlu0 %941
      %v943 = vsel %vm629, %v889, 0.0
      %944 = vadd.xlane.f32.xlu0 %v943
      %v945 = vpop.xlane.xlu0 %944
      %v946 = vsel %vm629, %v890, 0.0
      %947 = vadd.xlane.f32.xlu0 %v946
      %v948 = vpop.xlane.xlu0 %947
      %v949 = vsel %vm629, %v891, 0.0
      %950 = vadd.xlane.f32.xlu0 %v949
      %v951 = vpop.xlane.xlu0 %950
      %v952 = vsel %vm629, %v892, 0.0
      %953 = vadd.xlane.f32.xlu0 %v952
      %v954 = vpop.xlane.xlu0 %953
      %v955 = vsel %vm629, %v893, 0.0
      %956 = vadd.xlane.f32.xlu0 %v955
      %v957 = vpop.xlane.xlu0 %956
      %v958 = vsel %vm629, %v894, 0.0
      %959 = vadd.xlane.f32.xlu0 %v958
      %v960 = vpop.xlane.xlu0 %959
      %v961 = vsel %vm629, %v895, 0.0
      %962 = vadd.xlane.f32.xlu0 %v961
      %v963 = vpop.xlane.xlu0 %962
      %v964 = vsel %vm629, %v896, 0.0
      %965 = vadd.xlane.f32.xlu0 %v964
      %v966 = vpop.xlane.xlu0 %965
      %v967 = vsel %vm629, %v897, 0.0
      %968 = vadd.xlane.f32.xlu0 %v967
      %v969 = vpop.xlane.xlu0 %968
      %v970 = vsel %vm629, %v898, 0.0
      %971 = vadd.xlane.f32.xlu0 %v970
      %v972 = vpop.xlane.xlu0 %971
      %v973 = vsel %vm629, %v899, 0.0
      %974 = vadd.xlane.f32.xlu0 %v973
      %v975 = vpop.xlane.xlu0 %974
      %v976 = vsel %vm629, %v900, 0.0
      %977 = vadd.xlane.f32.xlu0 %v976
      %v978 = vpop.xlane.xlu0 %977
      %v979 = vsel %vm629, %v901, 0.0
      %980 = vadd.xlane.f32.xlu0 %v979
      %v981 = vpop.xlane.xlu0 %980
      %v982 = vsel %vm629, %v902, 0.0
      %983 = vadd.xlane.f32.xlu0 %v982
      %v984 = vpop.xlane.xlu0 %983
      %v985 = vsel %vm629, %v903, 0.0
      %986 = vadd.xlane.f32.xlu0 %v985
      %v987 = vpop.xlane.xlu0 %986
      %v988 = vsel %vm629, %v904, 0.0
      %989 = vadd.xlane.f32.xlu0 %v988
      %v990 = vpop.xlane.xlu0 %989
      %v991 = vsel %vm629, %v905, 0.0
      %992 = vadd.xlane.f32.xlu0 %v991
      %v993 = vpop.xlane.xlu0 %992
      %v994 = vsel %vm629, %v906, 0.0
      %995 = vadd.xlane.f32.xlu0 %v994
      %v996 = vpop.xlane.xlu0 %995
      %v997 = vsel %vm629, %v907, 0.0
      %998 = vadd.xlane.f32.xlu0 %v997
      %v999 = vpop.xlane.xlu0 %998
      %v1000 = vsel %vm629, %v908, 0.0
      %1001 = vadd.xlane.f32.xlu0 %v1000
      %v1002 = vpop.xlane.xlu0 %1001
      %v1003 = vsel %vm629, %v909, 0.0
      %1004 = vadd.xlane.f32.xlu0 %v1003
      %v1005 = vpop.xlane.xlu0 %1004
      %v1006 = vld [vmem:[#allocation2] sm:$0x1]
      %v1008 = vlaneseq
      %v1009 = vshrl.u32 %v1008, 7
      %v1010 = vsub.s32 0, %v1009
      %v1011 = vrot.slane %v1006, %v1010
      %v1013 = vadd.f32 %v912, %v1011
      %v1014 = vadd.f32 %v915, %v1011
      %v1015 = vadd.f32 %v918, %v1011
      %v1016 = vadd.f32 %v921, %v1011
      %v1017 = vadd.f32 %v924, %v1011
      %v1018 = vadd.f32 %v927, %v1011
      %v1019 = vadd.f32 %v930, %v1011
      %v1020 = vadd.f32 %v933, %v1011
      %v1021 = vadd.f32 %v936, %v1011
      %v1022 = vadd.f32 %v939, %v1011
      %v1023 = vadd.f32 %v942, %v1011
      %v1024 = vadd.f32 %v945, %v1011
      %v1025 = vadd.f32 %v948, %v1011
      %v1026 = vadd.f32 %v951, %v1011
      %v1027 = vadd.f32 %v954, %v1011
      %v1028 = vadd.f32 %v957, %v1011
      %v1029 = vadd.f32 %v960, %v1011
      %v1030 = vadd.f32 %v963, %v1011
      %v1031 = vadd.f32 %v966, %v1011
      %v1032 = vadd.f32 %v969, %v1011
      %v1033 = vadd.f32 %v972, %v1011
      %v1034 = vadd.f32 %v975, %v1011
      %v1035 = vadd.f32 %v978, %v1011
      %v1036 = vadd.f32 %v981, %v1011
      %v1037 = vadd.f32 %v984, %v1011
      %v1038 = vadd.f32 %v987, %v1011
      %v1039 = vadd.f32 %v990, %v1011
      %v1040 = vadd.f32 %v993, %v1011
      %v1041 = vadd.f32 %v996, %v1011
      %v1042 = vadd.f32 %v999, %v1011
      %v1043 = vadd.f32 %v1002, %v1011
      %v1044 = vadd.f32 %v1005, %v1011
      %vm1045 = vcmask 7168
      %1046 = vst.msk [vmem:[%s282] sm:$0xff] %vm1045, %v1013
      %1047 = vst.msk [vmem:[%s282 + $0x8] sm:$0xff] %vm1045, %v1014
      %1048 = vst.msk [vmem:[%s282 + $0x10] sm:$0xff] %vm1045, %v1015
      %1049 = vst.msk [vmem:[%s282 + $0x18] sm:$0xff] %vm1045, %v1016
      %1050 = vst.msk [vmem:[%s282 + $0x20] sm:$0xff] %vm1045, %v1017
      %1051 = vst.msk [vmem:[%s282 + $0x28] sm:$0xff] %vm1045, %v1018
      %1052 = vst.msk [vmem:[%s282 + $0x30] sm:$0xff] %vm1045, %v1019
      %1053 = vst.msk [vmem:[%s282 + $0x38] sm:$0xff] %vm1045, %v1020
      %1054 = vst.msk [vmem:[%s282 + $0x40] sm:$0xff] %vm1045, %v1021
      %1055 = vst.msk [vmem:[%s282 + $0x48] sm:$0xff] %vm1045, %v1022
      %1056 = vst.msk [vmem:[%s282 + $0x50] sm:$0xff] %vm1045, %v1023
      %1057 = vst.msk [vmem:[%s282 + $0x58] sm:$0xff] %vm1045, %v1024
      %1058 = vst.msk [vmem:[%s282 + $0x60] sm:$0xff] %vm1045, %v1025
      %1059 = vst.msk [vmem:[%s282 + $0x68] sm:$0xff] %vm1045, %v1026
      %1060 = vst.msk [vmem:[%s282 + $0x70] sm:$0xff] %vm1045, %v1027
      %1061 = vst.msk [vmem:[%s282 + $0x78] sm:$0xff] %vm1045, %v1028
      %1062 = vst.msk [vmem:[%s282 + $0x80] sm:$0xff] %vm1045, %v1029
      %1063 = vst.msk [vmem:[%s282 + $0x88] sm:$0xff] %vm1045, %v1030
      %1064 = vst.msk [vmem:[%s282 + $0x90] sm:$0xff] %vm1045, %v1031
      %1065 = vst.msk [vmem:[%s282 + $0x98] sm:$0xff] %vm1045, %v1032
      %1066 = vst.msk [vmem:[%s282 + $0xa0] sm:$0xff] %vm1045, %v1033
      %1067 = vst.msk [vmem:[%s282 + $0xa8] sm:$0xff] %vm1045, %v1034
      %1068 = vst.msk [vmem:[%s282 + $0xb0] sm:$0xff] %vm1045, %v1035
      %1069 = vst.msk [vmem:[%s282 + $0xb8] sm:$0xff] %vm1045, %v1036
      %1070 = vst.msk [vmem:[%s282 + $0xc0] sm:$0xff] %vm1045, %v1037
      %1071 = vst.msk [vmem:[%s282 + $0xc8] sm:$0xff] %vm1045, %v1038
      %1072 = vst.msk [vmem:[%s282 + $0xd0] sm:$0xff] %vm1045, %v1039
      %1073 = vst.msk [vmem:[%s282 + $0xd8] sm:$0xff] %vm1045, %v1040
      %1074 = vst.msk [vmem:[%s282 + $0xe0] sm:$0xff] %vm1045, %v1041
      %1075 = vst.msk [vmem:[%s282 + $0xe8] sm:$0xff] %vm1045, %v1042
      %1076 = vst.msk [vmem:[%s282 + $0xf0] sm:$0xff] %vm1045, %v1043
      %1077 = vst.msk [vmem:[%s282 + $0xf8] sm:$0xff] %vm1045, %v1044
      %s1078 = smul.u32 32, %s20
      %p1079 = scmp.lt.s32.totalorder %s1078, 63
      %s1080 = scalar_select %p1079, %s1078, 63
      %s1081 = smul.addr %s1080, 8
      %s1082 = scalar_lea.vmem %s7, %s1081
      // Predicated region
      $region49: #{tpu_custom_call.1} parent=47 // pred_check
        %p1083 = pneg %p190
      $region50: #{tpu_custom_call.1} parent=47 // pred_check_branch
        %1085 = sbr.rel (%p1083) target = $region52
      $region51: #{tpu_custom_call.1} parent=47 // pred_region
        %s1086 = smul.u32 32, %s20
      $region52: #{tpu_custom_call.1} parent=47 // pred_fallthru
        _
    $region48: #{tpu_custom_call.1} parent=5 // pred_fallthru
      _
    %p1087 = scmp.le.s32.totalorder 2, %s15
    // Predicated region
    $region53: #{tpu_custom_call.1} parent=5 // pred_check
      %p1088 = pneg %p1087
    $region54: #{tpu_custom_call.1} parent=5 // pred_check_branch
      %1090 = sbr.rel (%p1088) target = $region56
    $region55: #{tpu_custom_call.1} parent=5 // pred_region
      %s1091 = ssub.s32 %s15, 2
      // Predicated region
      $region57: #{tpu_custom_call.1} parent=55 // pred_check
        %p1092 = pneg %p196
      $region58: #{tpu_custom_call.1} parent=55 // pred_check_branch
        %1094 = sbr.rel (%p1092) target = $region60
      $region59: #{tpu_custom_call.1} parent=55 // pred_region
        %s1095 = smul.u32 32, %s21
        %p1096 = scmp.lt.s32.totalorder %s1095, 63
        %s1097 = scalar_select %p1096, %s1095, 63
        %s1098 = smul.addr %s1097, 8
        %s1099 = scalar_lea.vmem %s7, %s1098
      $region60: #{tpu_custom_call.1} parent=55 // pred_fallthru
        _
    $region56: #{tpu_custom_call.1} parent=5 // pred_fallthru
      _
  $region6: #{tpu_custom_call.1} parent=0 // loop_footer
    %s19 = sadd.s32 1, %s15
  $region7: #{tpu_custom_call.1} parent=0 // loop_footer_branch
    %14 = sbr.rel target = $region3
  $region8: #{tpu_custom_call.1} parent=0 // loop_exit
    _

</llo_original>
